<compile_context>
chip_gen: v7x
topology: tpu7x:2x2x1
jax: 0.10.0
libtpu: 0.0.40
codegen_flags: <defaults>
</compile_context>

<pallas_src>
import jax
import jax.numpy as jnp
from jax import lax
from jax.experimental import pallas as pl
from jax.experimental.pallas import tpu as pltpu

GRAY_R, GRAY_G, GRAY_B = 0.299, 0.587, 0.114
NSCAL = 7   # [brightness, contrast, saturation, hue, gray, do_hue, do_matmul] per image


def _vmem_capacity_bytes():
    try:
        info = pltpu.get_tpu_info()
        cap = getattr(info, "vmem_capacity_bytes", None)
        if cap:
            return int(cap)
    except Exception:
        pass
    return 64 << 20


def _make_kernel(H, W, SH):
    C = 3
    nstrips = H // SH
    inv_hw = 1.0 / float(H * W)
    unroll = 2 if nstrips >= 2 else 1

    def kernel(scal_ref, x_ref, mcol_ref, mrow_ref, o_ref, cbuf_ref):
        i = pl.program_id(0)
        base = i * NSCAL
        bf = scal_ref[base + 0]      # brightness factor
        cf = scal_ref[base + 1]      # contrast factor
        sf = scal_ref[base + 2]      # saturation factor
        hf = scal_ref[base + 3]      # hue shift (fraction of circle, |hf| <= 0.1)
        gflag = scal_ref[base + 4]   # grayscale flag (0/1)
        dhue = scal_ref[base + 5]    # apply-hue flag (== do_color, 0/1)
        do_mm = scal_ref[base + 6]   # blur-or-flip flag (0/1): run the MXU matmuls

        def strip(c, s):
            start = pl.multiple_of(c * H + s * SH, SH)
            return x_ref[0, pl.ds(start, SH), :]

        # ---- pass 1: mean grayscale of brightness-adjusted image (vreg carry, no VMEM RMW) ----
        def p1(s, psum):
            r = jnp.clip(strip(0, s) * bf, 0.0, 1.0)
            g = jnp.clip(strip(1, s) * bf, 0.0, 1.0)
            b = jnp.clip(strip(2, s) * bf, 0.0, 1.0)
            gray = GRAY_R * r + GRAY_G * g + GRAY_B * b
            return psum + jnp.sum(gray, axis=0, keepdims=True)   # cheap sublane reduce

        psum = lax.fori_loop(0, nstrips, p1, jnp.zeros((1, W), jnp.float32), unroll=unroll)
        m = jnp.sum(psum, axis=1, keepdims=True) * inv_hw         # single cross-lane reduce

        # hoisted loop invariants (JAX does not CSE these per iteration)
        coff = (1.0 - cf) * m
        one_m_sf = 1.0 - sf

        # ---- pass 2: brightness / contrast / saturation / hue / grayscale, strip-tiled ----
        def p2(s, carry):
            r = jnp.clip(strip(0, s) * bf, 0.0, 1.0)
            g = jnp.clip(strip(1, s) * bf, 0.0, 1.0)
            b = jnp.clip(strip(2, s) * bf, 0.0, 1.0)
            # contrast: blend with global mean gray
            r = jnp.clip(cf * r + coff, 0.0, 1.0)
            g = jnp.clip(cf * g + coff, 0.0, 1.0)
            b = jnp.clip(cf * b + coff, 0.0, 1.0)
            # saturation: blend with per-pixel gray
            gray = GRAY_R * r + GRAY_G * g + GRAY_B * b
            gs = one_m_sf * gray
            r = jnp.clip(sf * r + gs, 0.0, 1.0)
            g = jnp.clip(sf * g + gs, 0.0, 1.0)
            b = jnp.clip(sf * b + gs, 0.0, 1.0)
            # hue: RGB -> HSV -> shift -> RGB, branch-free, range-bounded wraps (no jnp.mod)
            maxc = jnp.maximum(jnp.maximum(r, g), b)
            minc = jnp.minimum(jnp.minimum(r, g), b)
            d = maxc - minc
            v = maxc
            s_hsv = d * pl.reciprocal(jnp.where(maxc > 0.0, maxc, 1.0), approx=True)
            inv_d = pl.reciprocal(jnp.where(d > 0.0, d, 1.0), approx=True)
            h = jnp.where(maxc == r, (g - b) * inv_d,
                jnp.where(maxc == g, 2.0 + (b - r) * inv_d,
                                     4.0 + (r - g) * inv_d))
            h = h * (1.0 / 6.0)                         # in [-1/6, 5/6]
            h = jnp.where(h < 0.0, h + 1.0, h)          # wrap to [0, 1)
            h = jnp.where(d > 0.0, h, 0.0)
            hs = h + hf                                  # in (-0.1, 1.1)
            hs = jnp.where(hs < 0.0, hs + 1.0, hs)
            hs = jnp.where(hs >= 1.0, hs - 1.0, hs)
            h6 = hs * 6.0                                # in [0, 6)

            def hsv_chan(n):
                k = n + h6                               # in [n, n+6)
                k = jnp.where(k >= 6.0, k - 6.0, k)
                a = jnp.clip(jnp.minimum(k, 4.0 - k), 0.0, 1.0)
                return v * (1.0 - s_hsv * a)

            r = r + dhue * (hsv_chan(5.0) - r)
            g = g + dhue * (hsv_chan(3.0) - g)
            b = b + dhue * (hsv_chan(1.0) - b)
            # random grayscale
            gray = GRAY_R * r + GRAY_G * g + GRAY_B * b
            r = r + gflag * (gray - r)
            g = g + gflag * (gray - g)
            b = b + gflag * (gray - b)
            # write processed strips into the staging buffer
            s0 = pl.multiple_of(0 * H + s * SH, SH)
            s1 = pl.multiple_of(1 * H + s * SH, SH)
            s2 = pl.multiple_of(2 * H + s * SH, SH)
            cbuf_ref[pl.ds(s0, SH), :] = r
            cbuf_ref[pl.ds(s1, SH), :] = g
            cbuf_ref[pl.ds(s2, SH), :] = b
            return carry

        lax.fori_loop(0, nstrips, p2, 0, unroll=unroll)

        # ---- separable blur (+ folded flip) as per-channel MXU matmuls, gated per image ----
        @pl.when(do_mm > 0.5)
        def _():
            mcol16 = mcol_ref[0]          # (W, W) bf16, blur + flip folded in
            mrow16 = mrow_ref[0]          # (H, H) bf16, row blur
            for c in range(C):            # per-channel: no (3H,W) temps, direct stores
                blk = cbuf_ref[pl.ds(c * H, H), :].astype(jnp.bfloat16)
                tcol = jnp.dot(blk, mcol16, preferred_element_type=jnp.float32)
                out = jnp.dot(mrow16, tcol.astype(jnp.bfloat16),
                              preferred_element_type=jnp.float32)
                o_ref[0, pl.ds(c * H, H), :] = out.astype(o_ref.dtype)

        @pl.when(do_mm <= 0.5)
        def _():
            # no blur and no flip: exact pass-through of the color-jittered image
            o_ref[0, :, :] = cbuf_ref[...]

    return kernel


def kornia_augmentation_pipeline(x, key, *, s_color=0.5, p_color=0.8, p_flip=0.5,
                                 p_gray=0.2, p_blur=0.5, kernel_min=0.1, kernel_max=2.0):
    """x: (B, 3, H, W) float32 in [0, 1]."""
    B, C, H, W = x.shape
    assert C == 3, "ColorJitter / Grayscale require RGB input"
    x = x.astype(jnp.float32)

    ksize = int(kernel_max * 2 * 2 + 1)
    khalf = ksize // 2

    # ---- per-image random parameters (plain JAX glue) ----
    ks = jax.random.split(key, 9)
    flip = jax.random.bernoulli(ks[0], p_flip, (B,)).astype(jnp.float32)
    do_color = jax.random.bernoulli(ks[1], p_color, (B,)).astype(jnp.float32)
    amt = 0.8 * s_color
    hue_amt = 0.2 * s_color
    bf = jax.random.uniform(ks[2], (B,), minval=1.0 - amt, maxval=1.0 + amt)
    cf = jax.random.uniform(ks[3], (B,), minval=1.0 - amt, maxval=1.0 + amt)
    sf = jax.random.uniform(ks[4], (B,), minval=1.0 - amt, maxval=1.0 + amt)
    hf = jax.random.uniform(ks[5], (B,), minval=-hue_amt, maxval=hue_amt)
    bf = do_color * bf + (1.0 - do_color)
    cf = do_color * cf + (1.0 - do_color)
    sf = do_color * sf + (1.0 - do_color)
    hf = do_color * hf
    gray = jax.random.bernoulli(ks[6], p_gray, (B,)).astype(jnp.float32)
    blur = jax.random.bernoulli(ks[7], p_blur, (B,)).astype(jnp.float32)
    sigma = jax.random.uniform(ks[8], (B,), minval=kernel_min, maxval=kernel_max)
    do_mm = jnp.maximum(blur, flip)   # only run the matmul phase if blur or flip applies

    # flat 1-D SMEM scalar table (avoids the 2-D SMEM padding blowup)
    scal = jnp.stack([bf, cf, sf, hf, gray, do_color, do_mm], axis=1)
    scal = scal.astype(jnp.float32).reshape(-1)                          # (B * NSCAL,)

    # normalized gaussian taps per image; delta (identity) taps when blur is off
    taps = jnp.arange(ksize, dtype=jnp.float32) - khalf
    gk = jnp.exp(-(taps[None, :] ** 2) / (2.0 * sigma[:, None] ** 2))
    gk = gk / jnp.sum(gk, axis=1, keepdims=True)                         # (B, ksize)
    delta = jnp.zeros((ksize,), jnp.float32).at[khalf].set(1.0)
    gk = blur[:, None] * gk + (1.0 - blur[:, None]) * delta[None, :]

    # ---- banded reflect-border blur matrices, built here with vectorized XLA ops ----
    # (moves the former in-kernel 9-tap compare/select build off the kernel's VALU path)
    itaps = jnp.arange(ksize) - khalf

    def reflect_idx(n):
        j = jnp.arange(n)
        p = j[None, :] + itaps[:, None]            # (ksize, n): input index per output idx
        p = jnp.where(p < 0, -p, p)
        p = jnp.where(p >= n, 2 * (n - 1) - p, p)
        return jnp.clip(p, 0, n - 1)               # guard tiny images

    pw = reflect_idx(W)                            # (ksize, W)
    ph = reflect_idx(H)                            # (ksize, H)
    iw = jnp.arange(W)
    ih = jnp.arange(H)
    basis_nf = (pw[:, :, None] == iw[None, None, :]).astype(jnp.float32)            # [t, j, i]
    basis_fl = (((W - 1) - pw)[:, :, None] == iw[None, None, :]).astype(jnp.float32)
    basis_row = (ph[:, :, None] == ih[None, None, :]).astype(jnp.float32)           # [t, i, k]

    # column matrix: img @ mcol ; flip folded in.  row matrix: mrow @ img
    mcol = (jnp.einsum('bt,tji->bij', gk * (1.0 - flip[:, None]), basis_nf)
            + jnp.einsum('bt,tji->bij', gk * flip[:, None], basis_fl)).astype(jnp.bfloat16)
    mrow = jnp.einsum('bt,tik->bik', gk, basis_row).astype(jnp.bfloat16)             # (B,H,H)

    # strip height for the elementwise phase: keep the HSV working set in vregs
    # (narrower strips for wide images so ~12-15 live temporaries fit the vreg file)
    target = 16 if W <= 256 else 8
    if H % target == 0:
        SH = target
    elif H % 8 == 0:
        SH = 8
    elif H % 16 == 0:
        SH = 16
    else:
        SH = H

    # generation-aware VMEM budget with headroom for Mosaic internal scratch
    # TODO(synk): on v6e-class MXUs, padding W/H up to a multiple of 128 would recover
    #             MXU fill and unmasked stores for 224-class shapes; not done here.
    img_bytes = 3 * H * W * 4
    mat_bytes = 2 * (H * H + W * W)                    # one bf16 copy of both matrices
    needed = (4 * img_bytes                            # double-buffered in + out blocks
              + img_bytes                              # cbuf scratch
              + 2 * mat_bytes                          # double-buffered mcol/mrow blocks
              + 4 * H * W * 4                          # per-channel matmul temporaries
              + (6 << 20))                             # internal scratch headroom
    cap = _vmem_capacity_bytes()
    vmem_limit = int(max(32 << 20, min(needed, cap - (8 << 20))))

    kernel = _make_kernel(H, W, SH)
    out = pl.pallas_call(
        kernel,
        out_shape=jax.ShapeDtypeStruct((B, 3 * H, W), jnp.float32),
        grid_spec=pltpu.PrefetchScalarGridSpec(
            num_scalar_prefetch=0,
            grid=(B,),
            in_specs=[
                pl.BlockSpec(memory_space=pltpu.MemorySpace.SMEM),        # scalar table
                pl.BlockSpec((1, 3 * H, W), lambda i: (i, 0, 0)),          # stacked image
                pl.BlockSpec((1, W, W), lambda i: (i, 0, 0)),              # per-image mcol (bf16)
                pl.BlockSpec((1, H, H), lambda i: (i, 0, 0)),              # per-image mrow (bf16)
            ],
            out_specs=pl.BlockSpec((1, 3 * H, W), lambda i: (i, 0, 0)),
            scratch_shapes=[
                pltpu.VMEM((3 * H, W), jnp.float32),                       # color-processed staging
            ],
        ),
        compiler_params=pltpu.CompilerParams(
            dimension_semantics=("parallel",),
            vmem_limit_bytes=vmem_limit,
        ),
    )(scal, x.reshape(B, 3 * H, W), mcol, mrow)
    return out.reshape(B, C, H, W)


if __name__ == "__main__":
    key = jax.random.PRNGKey(0)
    k_x, k_aug = jax.random.split(key)
    B, C, H, W = 2, 3, 16, 16
    x = jax.random.uniform(k_x, (B, C, H, W), dtype=jnp.float32)

    out = kornia_augmentation_pipeline(x, k_aug)
    out = jax.block_until_ready(out)

    assert out.shape == (B, C, H, W)
    assert out.dtype == jnp.float32
    assert bool(jnp.all(jnp.isfinite(out)))
    print("KERNEL_OK")
</pallas_src>

<mosaic_0001>
module attributes {stable_mosaic.version = 11 : i64} {
  func.func @kernel(%arg0: i32, %arg1: memref<14xf32, #tpu.memory_space<smem>>, %arg2: memref<1x48x16xf32, #tpu.memory_space<vmem>>, %arg3: memref<1x16x16xbf16, #tpu.memory_space<vmem>>, %arg4: memref<1x16x16xbf16, #tpu.memory_space<vmem>>, %arg5: memref<1x48x16xf32, #tpu.memory_space<vmem>>, %arg6: memref<48x16xf32, #tpu.memory_space<vmem>>) attributes {dimension_semantics = [#tpu.dimension_semantics<parallel>], iteration_bounds = array<i64: 2>, scalar_prefetch = 0 : i64, scratch_operands = 1 : i64, tpu.core_type = #tpu.core_type<tc>, window_params = [{transform_indices = @transform_0, window_bounds = array<i64: 14>}, {transform_indices = @transform_1, window_bounds = array<i64: 1, 48, 16>}, {transform_indices = @transform_2, window_bounds = array<i64: 1, 16, 16>}, {transform_indices = @transform_3, window_bounds = array<i64: 1, 16, 16>}, {transform_indices = @transform_4, window_bounds = array<i64: 1, 48, 16>}]} {
    %c7_i32 = arith.constant 7 : i32
    %0 = arith.muli %arg0, %c7_i32 : i32
    %c0_i32 = arith.constant 0 : i32
    %1 = arith.addi %0, %c0_i32 : i32
    %2 = arith.index_cast %1 : i32 to index
    %3 = memref.load %arg1[%2] : memref<14xf32, #tpu.memory_space<smem>>
    %c1_i32 = arith.constant 1 : i32
    %4 = arith.addi %0, %c1_i32 : i32
    %5 = arith.index_cast %4 : i32 to index
    %6 = memref.load %arg1[%5] : memref<14xf32, #tpu.memory_space<smem>>
    %c2_i32 = arith.constant 2 : i32
    %7 = arith.addi %0, %c2_i32 : i32
    %8 = arith.index_cast %7 : i32 to index
    %9 = memref.load %arg1[%8] : memref<14xf32, #tpu.memory_space<smem>>
    %c3_i32 = arith.constant 3 : i32
    %10 = arith.addi %0, %c3_i32 : i32
    %11 = arith.index_cast %10 : i32 to index
    %12 = memref.load %arg1[%11] : memref<14xf32, #tpu.memory_space<smem>>
    %c4_i32 = arith.constant 4 : i32
    %13 = arith.addi %0, %c4_i32 : i32
    %14 = arith.index_cast %13 : i32 to index
    %15 = memref.load %arg1[%14] : memref<14xf32, #tpu.memory_space<smem>>
    %c5_i32 = arith.constant 5 : i32
    %16 = arith.addi %0, %c5_i32 : i32
    %17 = arith.index_cast %16 : i32 to index
    %18 = memref.load %arg1[%17] : memref<14xf32, #tpu.memory_space<smem>>
    %c6_i32 = arith.constant 6 : i32
    %19 = arith.addi %0, %c6_i32 : i32
    %20 = arith.index_cast %19 : i32 to index
    %21 = memref.load %arg1[%20] : memref<14xf32, #tpu.memory_space<smem>>
    %cst = arith.constant 0.000000e+00 : f32
    %22 = vector.broadcast %cst : f32 to vector<1x16xf32>
    %c0_i32_0 = arith.constant 0 : i32
    %c16_i32 = arith.constant 16 : i32
    %23 = arith.muli %c0_i32_0, %c16_i32 : i32
    %c0_i32_1 = arith.constant 0 : i32
    %24 = arith.addi %c0_i32_1, %23 : i32
    %25 = tpu.assume_multiple %24, 16 : i32
    %c0 = arith.constant 0 : index
    %26 = arith.index_cast %25 : i32 to index
    %c0_2 = arith.constant 0 : index
    %27 = vector.load %arg2[%c0, %26, %c0_2] : memref<1x48x16xf32, #tpu.memory_space<vmem>>, vector<1x16x16xf32>
    %28 = vector.shape_cast %27 : vector<1x16x16xf32> to vector<16x16xf32>
    %29 = vector.broadcast %3 : f32 to vector<16x16xf32>
    %30 = arith.mulf %28, %29 : vector<16x16xf32>
    %cst_3 = arith.constant 0.000000e+00 : f32
    %cst_4 = arith.constant 1.000000e+00 : f32
    %31 = vector.broadcast %cst_3 : f32 to vector<16x16xf32>
    %32 = arith.maximumf %31, %30 : vector<16x16xf32>
    %33 = vector.broadcast %cst_4 : f32 to vector<16x16xf32>
    %34 = arith.minimumf %33, %32 : vector<16x16xf32>
    %c16_i32_5 = arith.constant 16 : i32
    %35 = arith.muli %c0_i32_0, %c16_i32_5 : i32
    %c16_i32_6 = arith.constant 16 : i32
    %36 = arith.addi %c16_i32_6, %35 : i32
    %37 = tpu.assume_multiple %36, 16 : i32
    %c0_7 = arith.constant 0 : index
    %38 = arith.index_cast %37 : i32 to index
    %c0_8 = arith.constant 0 : index
    %39 = vector.load %arg2[%c0_7, %38, %c0_8] : memref<1x48x16xf32, #tpu.memory_space<vmem>>, vector<1x16x16xf32>
    %40 = vector.shape_cast %39 : vector<1x16x16xf32> to vector<16x16xf32>
    %41 = vector.broadcast %3 : f32 to vector<16x16xf32>
    %42 = arith.mulf %40, %41 : vector<16x16xf32>
    %cst_9 = arith.constant 0.000000e+00 : f32
    %cst_10 = arith.constant 1.000000e+00 : f32
    %43 = vector.broadcast %cst_9 : f32 to vector<16x16xf32>
    %44 = arith.maximumf %43, %42 : vector<16x16xf32>
    %45 = vector.broadcast %cst_10 : f32 to vector<16x16xf32>
    %46 = arith.minimumf %45, %44 : vector<16x16xf32>
    %c16_i32_11 = arith.constant 16 : i32
    %47 = arith.muli %c0_i32_0, %c16_i32_11 : i32
    %c32_i32 = arith.constant 32 : i32
    %48 = arith.addi %c32_i32, %47 : i32
    %49 = tpu.assume_multiple %48, 16 : i32
    %c0_12 = arith.constant 0 : index
    %50 = arith.index_cast %49 : i32 to index
    %c0_13 = arith.constant 0 : index
    %51 = vector.load %arg2[%c0_12, %50, %c0_13] : memref<1x48x16xf32, #tpu.memory_space<vmem>>, vector<1x16x16xf32>
    %52 = vector.shape_cast %51 : vector<1x16x16xf32> to vector<16x16xf32>
    %53 = vector.broadcast %3 : f32 to vector<16x16xf32>
    %54 = arith.mulf %52, %53 : vector<16x16xf32>
    %cst_14 = arith.constant 0.000000e+00 : f32
    %cst_15 = arith.constant 1.000000e+00 : f32
    %55 = vector.broadcast %cst_14 : f32 to vector<16x16xf32>
    %56 = arith.maximumf %55, %54 : vector<16x16xf32>
    %57 = vector.broadcast %cst_15 : f32 to vector<16x16xf32>
    %58 = arith.minimumf %57, %56 : vector<16x16xf32>
    %cst_16 = arith.constant 2.990000e-01 : f32
    %59 = vector.broadcast %cst_16 : f32 to vector<16x16xf32>
    %60 = arith.mulf %59, %34 : vector<16x16xf32>
    %cst_17 = arith.constant 5.870000e-01 : f32
    %61 = vector.broadcast %cst_17 : f32 to vector<16x16xf32>
    %62 = arith.mulf %61, %46 : vector<16x16xf32>
    %63 = arith.addf %60, %62 : vector<16x16xf32>
    %cst_18 = arith.constant 1.140000e-01 : f32
    %64 = vector.broadcast %cst_18 : f32 to vector<16x16xf32>
    %65 = arith.mulf %64, %58 : vector<16x16xf32>
    %66 = arith.addf %63, %65 : vector<16x16xf32>
    %cst_19 = arith.constant dense<0.000000e+00> : vector<16xf32>
    %67 = vector.multi_reduction <add>, %66, %cst_19 [0] : vector<16x16xf32> to vector<16xf32>
    %68 = vector.shape_cast %67 : vector<16xf32> to vector<1x16xf32>
    %69 = arith.addf %22, %68 : vector<1x16xf32>
    %c1_i32_20 = arith.constant 1 : i32
    %cst_21 = arith.constant dense<0.000000e+00> : vector<1xf32>
    %70 = vector.multi_reduction <add>, %69, %cst_21 [1] : vector<1x16xf32> to vector<1xf32>
    %71 = vector.shape_cast %70 : vector<1xf32> to vector<1x1xf32>
    %cst_22 = arith.constant 3.906250e-03 : f32
    %72 = vector.broadcast %cst_22 : f32 to vector<1x1xf32>
    %73 = arith.mulf %71, %72 : vector<1x1xf32>
    %cst_23 = arith.constant 1.000000e+00 : f32
    %74 = arith.subf %cst_23, %6 : f32
    %75 = vector.broadcast %74 : f32 to vector<1x1xf32>
    %76 = arith.mulf %75, %73 : vector<1x1xf32>
    %cst_24 = arith.constant 1.000000e+00 : f32
    %77 = arith.subf %cst_24, %9 : f32
    %c0_i32_25 = arith.constant 0 : i32
    %c16_i32_26 = arith.constant 16 : i32
    %78 = arith.muli %c0_i32_25, %c16_i32_26 : i32
    %c0_i32_27 = arith.constant 0 : i32
    %79 = arith.addi %c0_i32_27, %78 : i32
    %80 = tpu.assume_multiple %79, 16 : i32
    %c0_28 = arith.constant 0 : index
    %81 = arith.index_cast %80 : i32 to index
    %c0_29 = arith.constant 0 : index
    %82 = vector.load %arg2[%c0_28, %81, %c0_29] : memref<1x48x16xf32, #tpu.memory_space<vmem>>, vector<1x16x16xf32>
    %83 = vector.shape_cast %82 : vector<1x16x16xf32> to vector<16x16xf32>
    %84 = vector.broadcast %3 : f32 to vector<16x16xf32>
    %85 = arith.mulf %83, %84 : vector<16x16xf32>
    %cst_30 = arith.constant 0.000000e+00 : f32
    %cst_31 = arith.constant 1.000000e+00 : f32
    %86 = vector.broadcast %cst_30 : f32 to vector<16x16xf32>
    %87 = arith.maximumf %86, %85 : vector<16x16xf32>
    %88 = vector.broadcast %cst_31 : f32 to vector<16x16xf32>
    %89 = arith.minimumf %88, %87 : vector<16x16xf32>
    %c16_i32_32 = arith.constant 16 : i32
    %90 = arith.muli %c0_i32_25, %c16_i32_32 : i32
    %c16_i32_33 = arith.constant 16 : i32
    %91 = arith.addi %c16_i32_33, %90 : i32
    %92 = tpu.assume_multiple %91, 16 : i32
    %c0_34 = arith.constant 0 : index
    %93 = arith.index_cast %92 : i32 to index
    %c0_35 = arith.constant 0 : index
    %94 = vector.load %arg2[%c0_34, %93, %c0_35] : memref<1x48x16xf32, #tpu.memory_space<vmem>>, vector<1x16x16xf32>
    %95 = vector.shape_cast %94 : vector<1x16x16xf32> to vector<16x16xf32>
    %96 = vector.broadcast %3 : f32 to vector<16x16xf32>
    %97 = arith.mulf %95, %96 : vector<16x16xf32>
    %cst_36 = arith.constant 0.000000e+00 : f32
    %cst_37 = arith.constant 1.000000e+00 : f32
    %98 = vector.broadcast %cst_36 : f32 to vector<16x16xf32>
    %99 = arith.maximumf %98, %97 : vector<16x16xf32>
    %100 = vector.broadcast %cst_37 : f32 to vector<16x16xf32>
    %101 = arith.minimumf %100, %99 : vector<16x16xf32>
    %c16_i32_38 = arith.constant 16 : i32
    %102 = arith.muli %c0_i32_25, %c16_i32_38 : i32
    %c32_i32_39 = arith.constant 32 : i32
    %103 = arith.addi %c32_i32_39, %102 : i32
    %104 = tpu.assume_multiple %103, 16 : i32
    %c0_40 = arith.constant 0 : index
    %105 = arith.index_cast %104 : i32 to index
    %c0_41 = arith.constant 0 : index
    %106 = vector.load %arg2[%c0_40, %105, %c0_41] : memref<1x48x16xf32, #tpu.memory_space<vmem>>, vector<1x16x16xf32>
    %107 = vector.shape_cast %106 : vector<1x16x16xf32> to vector<16x16xf32>
    %108 = vector.broadcast %3 : f32 to vector<16x16xf32>
    %109 = arith.mulf %107, %108 : vector<16x16xf32>
    %cst_42 = arith.constant 0.000000e+00 : f32
    %cst_43 = arith.constant 1.000000e+00 : f32
    %110 = vector.broadcast %cst_42 : f32 to vector<16x16xf32>
    %111 = arith.maximumf %110, %109 : vector<16x16xf32>
    %112 = vector.broadcast %cst_43 : f32 to vector<16x16xf32>
    %113 = arith.minimumf %112, %111 : vector<16x16xf32>
    %114 = vector.broadcast %6 : f32 to vector<16x16xf32>
    %115 = arith.mulf %114, %89 : vector<16x16xf32>
    %116 = vector.broadcast %76 : vector<1x1xf32> to vector<16x16xf32>
    %117 = arith.addf %115, %116 : vector<16x16xf32>
    %cst_44 = arith.constant 0.000000e+00 : f32
    %cst_45 = arith.constant 1.000000e+00 : f32
    %118 = vector.broadcast %cst_44 : f32 to vector<16x16xf32>
    %119 = arith.maximumf %118, %117 : vector<16x16xf32>
    %120 = vector.broadcast %cst_45 : f32 to vector<16x16xf32>
    %121 = arith.minimumf %120, %119 : vector<16x16xf32>
    %122 = vector.broadcast %6 : f32 to vector<16x16xf32>
    %123 = arith.mulf %122, %101 : vector<16x16xf32>
    %124 = vector.broadcast %76 : vector<1x1xf32> to vector<16x16xf32>
    %125 = arith.addf %123, %124 : vector<16x16xf32>
    %cst_46 = arith.constant 0.000000e+00 : f32
    %cst_47 = arith.constant 1.000000e+00 : f32
    %126 = vector.broadcast %cst_46 : f32 to vector<16x16xf32>
    %127 = arith.maximumf %126, %125 : vector<16x16xf32>
    %128 = vector.broadcast %cst_47 : f32 to vector<16x16xf32>
    %129 = arith.minimumf %128, %127 : vector<16x16xf32>
    %130 = vector.broadcast %6 : f32 to vector<16x16xf32>
    %131 = arith.mulf %130, %113 : vector<16x16xf32>
    %132 = vector.broadcast %76 : vector<1x1xf32> to vector<16x16xf32>
    %133 = arith.addf %131, %132 : vector<16x16xf32>
    %cst_48 = arith.constant 0.000000e+00 : f32
    %cst_49 = arith.constant 1.000000e+00 : f32
    %134 = vector.broadcast %cst_48 : f32 to vector<16x16xf32>
    %135 = arith.maximumf %134, %133 : vector<16x16xf32>
    %136 = vector.broadcast %cst_49 : f32 to vector<16x16xf32>
    %137 = arith.minimumf %136, %135 : vector<16x16xf32>
    %cst_50 = arith.constant 2.990000e-01 : f32
    %138 = vector.broadcast %cst_50 : f32 to vector<16x16xf32>
    %139 = arith.mulf %138, %121 : vector<16x16xf32>
    %cst_51 = arith.constant 5.870000e-01 : f32
    %140 = vector.broadcast %cst_51 : f32 to vector<16x16xf32>
    %141 = arith.mulf %140, %129 : vector<16x16xf32>
    %142 = arith.addf %139, %141 : vector<16x16xf32>
    %cst_52 = arith.constant 1.140000e-01 : f32
    %143 = vector.broadcast %cst_52 : f32 to vector<16x16xf32>
    %144 = arith.mulf %143, %137 : vector<16x16xf32>
    %145 = arith.addf %142, %144 : vector<16x16xf32>
    %146 = vector.broadcast %77 : f32 to vector<16x16xf32>
    %147 = arith.mulf %146, %145 : vector<16x16xf32>
    %148 = vector.broadcast %9 : f32 to vector<16x16xf32>
    %149 = arith.mulf %148, %121 : vector<16x16xf32>
    %150 = arith.addf %149, %147 : vector<16x16xf32>
    %cst_53 = arith.constant 0.000000e+00 : f32
    %cst_54 = arith.constant 1.000000e+00 : f32
    %151 = vector.broadcast %cst_53 : f32 to vector<16x16xf32>
    %152 = arith.maximumf %151, %150 : vector<16x16xf32>
    %153 = vector.broadcast %cst_54 : f32 to vector<16x16xf32>
    %154 = arith.minimumf %153, %152 : vector<16x16xf32>
    %155 = vector.broadcast %9 : f32 to vector<16x16xf32>
    %156 = arith.mulf %155, %129 : vector<16x16xf32>
    %157 = arith.addf %156, %147 : vector<16x16xf32>
    %cst_55 = arith.constant 0.000000e+00 : f32
    %cst_56 = arith.constant 1.000000e+00 : f32
    %158 = vector.broadcast %cst_55 : f32 to vector<16x16xf32>
    %159 = arith.maximumf %158, %157 : vector<16x16xf32>
    %160 = vector.broadcast %cst_56 : f32 to vector<16x16xf32>
    %161 = arith.minimumf %160, %159 : vector<16x16xf32>
    %162 = vector.broadcast %9 : f32 to vector<16x16xf32>
    %163 = arith.mulf %162, %137 : vector<16x16xf32>
    %164 = arith.addf %163, %147 : vector<16x16xf32>
    %cst_57 = arith.constant 0.000000e+00 : f32
    %cst_58 = arith.constant 1.000000e+00 : f32
    %165 = vector.broadcast %cst_57 : f32 to vector<16x16xf32>
    %166 = arith.maximumf %165, %164 : vector<16x16xf32>
    %167 = vector.broadcast %cst_58 : f32 to vector<16x16xf32>
    %168 = arith.minimumf %167, %166 : vector<16x16xf32>
    %169 = arith.maximumf %154, %161 : vector<16x16xf32>
    %170 = arith.maximumf %169, %168 : vector<16x16xf32>
    %171 = arith.minimumf %154, %161 : vector<16x16xf32>
    %172 = arith.minimumf %171, %168 : vector<16x16xf32>
    %173 = arith.subf %170, %172 : vector<16x16xf32>
    %cst_59 = arith.constant 0.000000e+00 : f32
    %174 = vector.broadcast %cst_59 : f32 to vector<16x16xf32>
    %175 = arith.cmpf ogt, %170, %174 : vector<16x16xf32>
    %cst_60 = arith.constant 1.000000e+00 : f32
    %176 = vector.broadcast %cst_60 : f32 to vector<16x16xf32>
    %177 = arith.select %175, %170, %176 : vector<16x16xi1>, vector<16x16xf32>
    %178 = tpu.reciprocal %177 {approx = true} : vector<16x16xf32> -> vector<16x16xf32>
    %179 = arith.mulf %173, %178 : vector<16x16xf32>
    %cst_61 = arith.constant 0.000000e+00 : f32
    %180 = vector.broadcast %cst_61 : f32 to vector<16x16xf32>
    %181 = arith.cmpf ogt, %173, %180 : vector<16x16xf32>
    %cst_62 = arith.constant 1.000000e+00 : f32
    %182 = vector.broadcast %cst_62 : f32 to vector<16x16xf32>
    %183 = arith.select %181, %173, %182 : vector<16x16xi1>, vector<16x16xf32>
    %184 = tpu.reciprocal %183 {approx = true} : vector<16x16xf32> -> vector<16x16xf32>
    %185 = arith.cmpf oeq, %170, %154 : vector<16x16xf32>
    %186 = arith.subf %161, %168 : vector<16x16xf32>
    %187 = arith.mulf %186, %184 : vector<16x16xf32>
    %188 = arith.cmpf oeq, %170, %161 : vector<16x16xf32>
    %189 = arith.subf %168, %154 : vector<16x16xf32>
    %190 = arith.mulf %189, %184 : vector<16x16xf32>
    %cst_63 = arith.constant 2.000000e+00 : f32
    %191 = vector.broadcast %cst_63 : f32 to vector<16x16xf32>
    %192 = arith.addf %191, %190 : vector<16x16xf32>
    %193 = arith.subf %154, %161 : vector<16x16xf32>
    %194 = arith.mulf %193, %184 : vector<16x16xf32>
    %cst_64 = arith.constant 4.000000e+00 : f32
    %195 = vector.broadcast %cst_64 : f32 to vector<16x16xf32>
    %196 = arith.addf %195, %194 : vector<16x16xf32>
    %197 = arith.select %188, %192, %196 : vector<16x16xi1>, vector<16x16xf32>
    %198 = arith.select %185, %187, %197 : vector<16x16xi1>, vector<16x16xf32>
    %cst_65 = arith.constant 0.166666672 : f32
    %199 = vector.broadcast %cst_65 : f32 to vector<16x16xf32>
    %200 = arith.mulf %198, %199 : vector<16x16xf32>
    %cst_66 = arith.constant 0.000000e+00 : f32
    %201 = vector.broadcast %cst_66 : f32 to vector<16x16xf32>
    %202 = arith.cmpf olt, %200, %201 : vector<16x16xf32>
    %cst_67 = arith.constant 1.000000e+00 : f32
    %203 = vector.broadcast %cst_67 : f32 to vector<16x16xf32>
    %204 = arith.addf %200, %203 : vector<16x16xf32>
    %205 = arith.select %202, %204, %200 : vector<16x16xi1>, vector<16x16xf32>
    %cst_68 = arith.constant 0.000000e+00 : f32
    %206 = vector.broadcast %cst_68 : f32 to vector<16x16xf32>
    %207 = arith.cmpf ogt, %173, %206 : vector<16x16xf32>
    %cst_69 = arith.constant 0.000000e+00 : f32
    %208 = vector.broadcast %cst_69 : f32 to vector<16x16xf32>
    %209 = arith.select %207, %205, %208 : vector<16x16xi1>, vector<16x16xf32>
    %210 = vector.broadcast %12 : f32 to vector<16x16xf32>
    %211 = arith.addf %209, %210 : vector<16x16xf32>
    %cst_70 = arith.constant 0.000000e+00 : f32
    %212 = vector.broadcast %cst_70 : f32 to vector<16x16xf32>
    %213 = arith.cmpf olt, %211, %212 : vector<16x16xf32>
    %cst_71 = arith.constant 1.000000e+00 : f32
    %214 = vector.broadcast %cst_71 : f32 to vector<16x16xf32>
    %215 = arith.addf %211, %214 : vector<16x16xf32>
    %216 = arith.select %213, %215, %211 : vector<16x16xi1>, vector<16x16xf32>
    %cst_72 = arith.constant 1.000000e+00 : f32
    %217 = vector.broadcast %cst_72 : f32 to vector<16x16xf32>
    %218 = arith.cmpf oge, %216, %217 : vector<16x16xf32>
    %cst_73 = arith.constant 1.000000e+00 : f32
    %219 = vector.broadcast %cst_73 : f32 to vector<16x16xf32>
    %220 = arith.subf %216, %219 : vector<16x16xf32>
    %221 = arith.select %218, %220, %216 : vector<16x16xi1>, vector<16x16xf32>
    %cst_74 = arith.constant 6.000000e+00 : f32
    %222 = vector.broadcast %cst_74 : f32 to vector<16x16xf32>
    %223 = arith.mulf %221, %222 : vector<16x16xf32>
    %cst_75 = arith.constant 5.000000e+00 : f32
    %224 = vector.broadcast %cst_75 : f32 to vector<16x16xf32>
    %225 = arith.addf %224, %223 : vector<16x16xf32>
    %cst_76 = arith.constant 6.000000e+00 : f32
    %226 = vector.broadcast %cst_76 : f32 to vector<16x16xf32>
    %227 = arith.cmpf oge, %225, %226 : vector<16x16xf32>
    %cst_77 = arith.constant 6.000000e+00 : f32
    %228 = vector.broadcast %cst_77 : f32 to vector<16x16xf32>
    %229 = arith.subf %225, %228 : vector<16x16xf32>
    %230 = arith.select %227, %229, %225 : vector<16x16xi1>, vector<16x16xf32>
    %cst_78 = arith.constant 4.000000e+00 : f32
    %231 = vector.broadcast %cst_78 : f32 to vector<16x16xf32>
    %232 = arith.subf %231, %230 : vector<16x16xf32>
    %233 = arith.minimumf %230, %232 : vector<16x16xf32>
    %cst_79 = arith.constant 0.000000e+00 : f32
    %cst_80 = arith.constant 1.000000e+00 : f32
    %234 = vector.broadcast %cst_79 : f32 to vector<16x16xf32>
    %235 = arith.maximumf %234, %233 : vector<16x16xf32>
    %236 = vector.broadcast %cst_80 : f32 to vector<16x16xf32>
    %237 = arith.minimumf %236, %235 : vector<16x16xf32>
    %238 = arith.mulf %179, %237 : vector<16x16xf32>
    %cst_81 = arith.constant 1.000000e+00 : f32
    %239 = vector.broadcast %cst_81 : f32 to vector<16x16xf32>
    %240 = arith.subf %239, %238 : vector<16x16xf32>
    %241 = arith.mulf %170, %240 : vector<16x16xf32>
    %242 = arith.subf %241, %154 : vector<16x16xf32>
    %243 = vector.broadcast %18 : f32 to vector<16x16xf32>
    %244 = arith.mulf %243, %242 : vector<16x16xf32>
    %245 = arith.addf %154, %244 : vector<16x16xf32>
    %cst_82 = arith.constant 3.000000e+00 : f32
    %246 = vector.broadcast %cst_82 : f32 to vector<16x16xf32>
    %247 = arith.addf %246, %223 : vector<16x16xf32>
    %cst_83 = arith.constant 6.000000e+00 : f32
    %248 = vector.broadcast %cst_83 : f32 to vector<16x16xf32>
    %249 = arith.cmpf oge, %247, %248 : vector<16x16xf32>
    %cst_84 = arith.constant 6.000000e+00 : f32
    %250 = vector.broadcast %cst_84 : f32 to vector<16x16xf32>
    %251 = arith.subf %247, %250 : vector<16x16xf32>
    %252 = arith.select %249, %251, %247 : vector<16x16xi1>, vector<16x16xf32>
    %cst_85 = arith.constant 4.000000e+00 : f32
    %253 = vector.broadcast %cst_85 : f32 to vector<16x16xf32>
    %254 = arith.subf %253, %252 : vector<16x16xf32>
    %255 = arith.minimumf %252, %254 : vector<16x16xf32>
    %cst_86 = arith.constant 0.000000e+00 : f32
    %cst_87 = arith.constant 1.000000e+00 : f32
    %256 = vector.broadcast %cst_86 : f32 to vector<16x16xf32>
    %257 = arith.maximumf %256, %255 : vector<16x16xf32>
    %258 = vector.broadcast %cst_87 : f32 to vector<16x16xf32>
    %259 = arith.minimumf %258, %257 : vector<16x16xf32>
    %260 = arith.mulf %179, %259 : vector<16x16xf32>
    %cst_88 = arith.constant 1.000000e+00 : f32
    %261 = vector.broadcast %cst_88 : f32 to vector<16x16xf32>
    %262 = arith.subf %261, %260 : vector<16x16xf32>
    %263 = arith.mulf %170, %262 : vector<16x16xf32>
    %264 = arith.subf %263, %161 : vector<16x16xf32>
    %265 = vector.broadcast %18 : f32 to vector<16x16xf32>
    %266 = arith.mulf %265, %264 : vector<16x16xf32>
    %267 = arith.addf %161, %266 : vector<16x16xf32>
    %cst_89 = arith.constant 1.000000e+00 : f32
    %268 = vector.broadcast %cst_89 : f32 to vector<16x16xf32>
    %269 = arith.addf %268, %223 : vector<16x16xf32>
    %cst_90 = arith.constant 6.000000e+00 : f32
    %270 = vector.broadcast %cst_90 : f32 to vector<16x16xf32>
    %271 = arith.cmpf oge, %269, %270 : vector<16x16xf32>
    %cst_91 = arith.constant 6.000000e+00 : f32
    %272 = vector.broadcast %cst_91 : f32 to vector<16x16xf32>
    %273 = arith.subf %269, %272 : vector<16x16xf32>
    %274 = arith.select %271, %273, %269 : vector<16x16xi1>, vector<16x16xf32>
    %cst_92 = arith.constant 4.000000e+00 : f32
    %275 = vector.broadcast %cst_92 : f32 to vector<16x16xf32>
    %276 = arith.subf %275, %274 : vector<16x16xf32>
    %277 = arith.minimumf %274, %276 : vector<16x16xf32>
    %cst_93 = arith.constant 0.000000e+00 : f32
    %cst_94 = arith.constant 1.000000e+00 : f32
    %278 = vector.broadcast %cst_93 : f32 to vector<16x16xf32>
    %279 = arith.maximumf %278, %277 : vector<16x16xf32>
    %280 = vector.broadcast %cst_94 : f32 to vector<16x16xf32>
    %281 = arith.minimumf %280, %279 : vector<16x16xf32>
    %282 = arith.mulf %179, %281 : vector<16x16xf32>
    %cst_95 = arith.constant 1.000000e+00 : f32
    %283 = vector.broadcast %cst_95 : f32 to vector<16x16xf32>
    %284 = arith.subf %283, %282 : vector<16x16xf32>
    %285 = arith.mulf %170, %284 : vector<16x16xf32>
    %286 = arith.subf %285, %168 : vector<16x16xf32>
    %287 = vector.broadcast %18 : f32 to vector<16x16xf32>
    %288 = arith.mulf %287, %286 : vector<16x16xf32>
    %289 = arith.addf %168, %288 : vector<16x16xf32>
    %cst_96 = arith.constant 2.990000e-01 : f32
    %290 = vector.broadcast %cst_96 : f32 to vector<16x16xf32>
    %291 = arith.mulf %290, %245 : vector<16x16xf32>
    %cst_97 = arith.constant 5.870000e-01 : f32
    %292 = vector.broadcast %cst_97 : f32 to vector<16x16xf32>
    %293 = arith.mulf %292, %267 : vector<16x16xf32>
    %294 = arith.addf %291, %293 : vector<16x16xf32>
    %cst_98 = arith.constant 1.140000e-01 : f32
    %295 = vector.broadcast %cst_98 : f32 to vector<16x16xf32>
    %296 = arith.mulf %295, %289 : vector<16x16xf32>
    %297 = arith.addf %294, %296 : vector<16x16xf32>
    %298 = arith.subf %297, %245 : vector<16x16xf32>
    %299 = vector.broadcast %15 : f32 to vector<16x16xf32>
    %300 = arith.mulf %299, %298 : vector<16x16xf32>
    %301 = arith.addf %245, %300 : vector<16x16xf32>
    %302 = arith.subf %297, %267 : vector<16x16xf32>
    %303 = vector.broadcast %15 : f32 to vector<16x16xf32>
    %304 = arith.mulf %303, %302 : vector<16x16xf32>
    %305 = arith.addf %267, %304 : vector<16x16xf32>
    %306 = arith.subf %297, %289 : vector<16x16xf32>
    %307 = vector.broadcast %15 : f32 to vector<16x16xf32>
    %308 = arith.mulf %307, %306 : vector<16x16xf32>
    %309 = arith.addf %289, %308 : vector<16x16xf32>
    %c16_i32_99 = arith.constant 16 : i32
    %310 = arith.muli %c0_i32_25, %c16_i32_99 : i32
    %c0_i32_100 = arith.constant 0 : i32
    %311 = arith.addi %c0_i32_100, %310 : i32
    %312 = tpu.assume_multiple %311, 16 : i32
    %c16_i32_101 = arith.constant 16 : i32
    %313 = arith.muli %c0_i32_25, %c16_i32_101 : i32
    %c16_i32_102 = arith.constant 16 : i32
    %314 = arith.addi %c16_i32_102, %313 : i32
    %315 = tpu.assume_multiple %314, 16 : i32
    %c16_i32_103 = arith.constant 16 : i32
    %316 = arith.muli %c0_i32_25, %c16_i32_103 : i32
    %c32_i32_104 = arith.constant 32 : i32
    %317 = arith.addi %c32_i32_104, %316 : i32
    %318 = tpu.assume_multiple %317, 16 : i32
    %319 = arith.index_cast %312 : i32 to index
    %c0_105 = arith.constant 0 : index
    %320 = vector.load %arg6[%319, %c0_105] : memref<48x16xf32, #tpu.memory_space<vmem>>, vector<16x16xf32>
    tpu.vector_store %arg6[%319, %c0_105], %301 {strides = array<i32>} : memref<48x16xf32, #tpu.memory_space<vmem>>, vector<16x16xf32>,
    %321 = arith.index_cast %315 : i32 to index
    %c0_106 = arith.constant 0 : index
    %322 = vector.load %arg6[%321, %c0_106] : memref<48x16xf32, #tpu.memory_space<vmem>>, vector<16x16xf32>
    tpu.vector_store %arg6[%321, %c0_106], %305 {strides = array<i32>} : memref<48x16xf32, #tpu.memory_space<vmem>>, vector<16x16xf32>,
    %323 = arith.index_cast %318 : i32 to index
    %c0_107 = arith.constant 0 : index
    %324 = vector.load %arg6[%323, %c0_107] : memref<48x16xf32, #tpu.memory_space<vmem>>, vector<16x16xf32>
    tpu.vector_store %arg6[%323, %c0_107], %309 {strides = array<i32>} : memref<48x16xf32, #tpu.memory_space<vmem>>, vector<16x16xf32>,
    %c1_i32_108 = arith.constant 1 : i32
    %cst_109 = arith.constant 5.000000e-01 : f32
    %325 = arith.cmpf ogt, %21, %cst_109 : f32
    %326 = arith.extui %325 : i1 to i32
    %c0_i32_110 = arith.constant 0 : i32
    %327 = arith.cmpi ne, %326, %c0_i32_110 : i32
    scf.if %327 {
      %c0_113 = arith.constant 0 : index
      %c0_114 = arith.constant 0 : index
      %c0_115 = arith.constant 0 : index
      %331 = vector.load %arg3[%c0_113, %c0_114, %c0_115] : memref<1x16x16xbf16, #tpu.memory_space<vmem>>, vector<1x16x16xbf16>
      %332 = vector.shape_cast %331 : vector<1x16x16xbf16> to vector<16x16xbf16>
      %c0_116 = arith.constant 0 : index
      %c0_117 = arith.constant 0 : index
      %c0_118 = arith.constant 0 : index
      %333 = vector.load %arg4[%c0_116, %c0_117, %c0_118] : memref<1x16x16xbf16, #tpu.memory_space<vmem>>, vector<1x16x16xbf16>
      %334 = vector.shape_cast %333 : vector<1x16x16xbf16> to vector<16x16xbf16>
      %c0_119 = arith.constant 0 : index
      %c0_120 = arith.constant 0 : index
      %335 = vector.load %arg6[%c0_119, %c0_120] : memref<48x16xf32, #tpu.memory_space<vmem>>, vector<16x16xf32>
      %336 = arith.truncf %335 : vector<16x16xf32> to vector<16x16xbf16>
      %cst_121 = arith.constant dense<0.000000e+00> : vector<16x16xf32>
      %337 = tpu.matmul %336, %332, %cst_121 {dimension_numbers = #tpu.dot_dimension_numbers<[1], [0], [0], [1], [0, 0, 1, 1], [], []>} : vector<16x16xbf16>, vector<16x16xbf16>, vector<16x16xf32> -> vector<16x16xf32>
      %338 = arith.truncf %337 : vector<16x16xf32> to vector<16x16xbf16>
      %cst_122 = arith.constant dense<0.000000e+00> : vector<16x16xf32>
      %339 = tpu.matmul %334, %338, %cst_122 {dimension_numbers = #tpu.dot_dimension_numbers<[1], [0], [0], [1], [0, 0, 1, 1], [], []>} : vector<16x16xbf16>, vector<16x16xbf16>, vector<16x16xf32> -> vector<16x16xf32>
      %c0_123 = arith.constant 0 : index
      %c0_124 = arith.constant 0 : index
      %c0_125 = arith.constant 0 : index
      %340 = vector.load %arg5[%c0_123, %c0_124, %c0_125] : memref<1x48x16xf32, #tpu.memory_space<vmem>>, vector<1x16x16xf32>
      %341 = vector.shape_cast %340 : vector<1x16x16xf32> to vector<16x16xf32>
      %342 = vector.shape_cast %339 : vector<16x16xf32> to vector<1x16x16xf32>
      tpu.vector_store %arg5[%c0_123, %c0_124, %c0_125], %342 {strides = array<i32>} : memref<1x48x16xf32, #tpu.memory_space<vmem>>, vector<1x16x16xf32>,
      %c16 = arith.constant 16 : index
      %c0_126 = arith.constant 0 : index
      %343 = vector.load %arg6[%c16, %c0_126] : memref<48x16xf32, #tpu.memory_space<vmem>>, vector<16x16xf32>
      %344 = arith.truncf %343 : vector<16x16xf32> to vector<16x16xbf16>
      %cst_127 = arith.constant dense<0.000000e+00> : vector<16x16xf32>
      %345 = tpu.matmul %344, %332, %cst_127 {dimension_numbers = #tpu.dot_dimension_numbers<[1], [0], [0], [1], [0, 0, 1, 1], [], []>} : vector<16x16xbf16>, vector<16x16xbf16>, vector<16x16xf32> -> vector<16x16xf32>
      %346 = arith.truncf %345 : vector<16x16xf32> to vector<16x16xbf16>
      %cst_128 = arith.constant dense<0.000000e+00> : vector<16x16xf32>
      %347 = tpu.matmul %334, %346, %cst_128 {dimension_numbers = #tpu.dot_dimension_numbers<[1], [0], [0], [1], [0, 0, 1, 1], [], []>} : vector<16x16xbf16>, vector<16x16xbf16>, vector<16x16xf32> -> vector<16x16xf32>
      %c0_129 = arith.constant 0 : index
      %c16_130 = arith.constant 16 : index
      %c0_131 = arith.constant 0 : index
      %348 = vector.load %arg5[%c0_129, %c16_130, %c0_131] : memref<1x48x16xf32, #tpu.memory_space<vmem>>, vector<1x16x16xf32>
      %349 = vector.shape_cast %348 : vector<1x16x16xf32> to vector<16x16xf32>
      %350 = vector.shape_cast %347 : vector<16x16xf32> to vector<1x16x16xf32>
      tpu.vector_store %arg5[%c0_129, %c16_130, %c0_131], %350 {strides = array<i32>} : memref<1x48x16xf32, #tpu.memory_space<vmem>>, vector<1x16x16xf32>,
      %c32 = arith.constant 32 : index
      %c0_132 = arith.constant 0 : index
      %351 = vector.load %arg6[%c32, %c0_132] : memref<48x16xf32, #tpu.memory_space<vmem>>, vector<16x16xf32>
      %352 = arith.truncf %351 : vector<16x16xf32> to vector<16x16xbf16>
      %cst_133 = arith.constant dense<0.000000e+00> : vector<16x16xf32>
      %353 = tpu.matmul %352, %332, %cst_133 {dimension_numbers = #tpu.dot_dimension_numbers<[1], [0], [0], [1], [0, 0, 1, 1], [], []>} : vector<16x16xbf16>, vector<16x16xbf16>, vector<16x16xf32> -> vector<16x16xf32>
      %354 = arith.truncf %353 : vector<16x16xf32> to vector<16x16xbf16>
      %cst_134 = arith.constant dense<0.000000e+00> : vector<16x16xf32>
      %355 = tpu.matmul %334, %354, %cst_134 {dimension_numbers = #tpu.dot_dimension_numbers<[1], [0], [0], [1], [0, 0, 1, 1], [], []>} : vector<16x16xbf16>, vector<16x16xbf16>, vector<16x16xf32> -> vector<16x16xf32>
      %c0_135 = arith.constant 0 : index
      %c32_136 = arith.constant 32 : index
      %c0_137 = arith.constant 0 : index
      %356 = vector.load %arg5[%c0_135, %c32_136, %c0_137] : memref<1x48x16xf32, #tpu.memory_space<vmem>>, vector<1x16x16xf32>
      %357 = vector.shape_cast %356 : vector<1x16x16xf32> to vector<16x16xf32>
      %358 = vector.shape_cast %355 : vector<16x16xf32> to vector<1x16x16xf32>
      tpu.vector_store %arg5[%c0_135, %c32_136, %c0_137], %358 {strides = array<i32>} : memref<1x48x16xf32, #tpu.memory_space<vmem>>, vector<1x16x16xf32>,
    } else {
    }
    %cst_111 = arith.constant 5.000000e-01 : f32
    %328 = arith.cmpf ole, %21, %cst_111 : f32
    %329 = arith.extui %328 : i1 to i32
    %c0_i32_112 = arith.constant 0 : i32
    %330 = arith.cmpi ne, %329, %c0_i32_112 : i32
    scf.if %330 {
      %c0_113 = arith.constant 0 : index
      %c0_114 = arith.constant 0 : index
      %331 = vector.load %arg6[%c0_113, %c0_114] : memref<48x16xf32, #tpu.memory_space<vmem>>, vector<48x16xf32>
      %c0_115 = arith.constant 0 : index
      %c0_116 = arith.constant 0 : index
      %c0_117 = arith.constant 0 : index
      %332 = vector.load %arg5[%c0_115, %c0_116, %c0_117] : memref<1x48x16xf32, #tpu.memory_space<vmem>>, vector<1x48x16xf32>
      %333 = vector.shape_cast %332 : vector<1x48x16xf32> to vector<48x16xf32>
      %334 = vector.shape_cast %331 : vector<48x16xf32> to vector<1x48x16xf32>
      tpu.vector_store %arg5[%c0_115, %c0_116, %c0_117], %334 {strides = array<i32>} : memref<1x48x16xf32, #tpu.memory_space<vmem>>, vector<1x48x16xf32>,
    } else {
    }
    return
  }
  func.func @transform_0(%arg0: i32) -> i32 {
    %c0_i32 = arith.constant 0 : i32
    %c0_i32_0 = arith.constant 0 : i32
    return %c0_i32 : i32
  }
  func.func @transform_1(%arg0: i32) -> (i32, i32, i32) {
    %c0_i32 = arith.constant 0 : i32
    %c0_i32_0 = arith.constant 0 : i32
    %c0_i32_1 = arith.constant 0 : i32
    return %arg0, %c0_i32, %c0_i32_0 : i32, i32, i32
  }
  func.func @transform_2(%arg0: i32) -> (i32, i32, i32) {
    %c0_i32 = arith.constant 0 : i32
    %c0_i32_0 = arith.constant 0 : i32
    %c0_i32_1 = arith.constant 0 : i32
    return %arg0, %c0_i32, %c0_i32_0 : i32, i32, i32
  }
  func.func @transform_3(%arg0: i32) -> (i32, i32, i32) {
    %c0_i32 = arith.constant 0 : i32
    %c0_i32_0 = arith.constant 0 : i32
    %c0_i32_1 = arith.constant 0 : i32
    return %arg0, %c0_i32, %c0_i32_0 : i32, i32, i32
  }
  func.func @transform_4(%arg0: i32) -> (i32, i32, i32) {
    %c0_i32 = arith.constant 0 : i32
    %c0_i32_0 = arith.constant 0 : i32
    %c0_i32_1 = arith.constant 0 : i32
    return %arg0, %c0_i32, %c0_i32_0 : i32, i32, i32
  }
}

</mosaic_0001>

<llo_original>
// kernel: tpu_custom_call.1
$region0: #{tpu_custom_call.1}
  #allocation0 [shape = 'u32[]', space=smem, size = 0x4, offset = 0x4, fixed_abs, tag = 'smem constant byte address 0x4 - core index']
  #allocation1 [shape = 'u32[144,128]{1,0:T(1,128)}', space=vmem, size = 0x12000, scoped, tag = 'internal scratch']
  #allocation2 [shape = 'f32[48,16]{1,0:T(8,128)}', space=vmem, size = 0x6000, scoped, tag = 'scratch operand']
  %s0 = inlined_call_operand.vmem [shape: f32[14], index: 0, kind: input, shape index: {}]
  %s1 = inlined_call_operand.vmem [shape: f32[2,48,16], index: 1, kind: input, shape index: {}]
  %s2 = inlined_call_operand.vmem [shape: bf16[2,16,16], index: 2, kind: input, shape index: {}]
  %s3 = inlined_call_operand.vmem [shape: bf16[2,16,16], index: 3, kind: input, shape index: {}]
  %s4 = inlined_call_operand.vmem [shape: f32[2,48,16], index: 4, kind: output, shape index: {}]
  %s5 = sld [smem:[#allocation0]]
  $region61: #{tpu_custom_call.1} parent=0
    _
  %s7 = ssub.s32 1, %s5
  %s8 = scalar_select 0, %s7, %s5
  $region1: #{tpu_custom_call.1} parent=0
    #allocation3 [shape = 'u8[512]{0}', space=smem, size = 0x200, scoped, tag = 'input window, operand 0, single buffered']
    #allocation4 [shape = 's32[2]{0}', space=sflag, size = 0x8, scoped, tag = 'scoped memory for tpu_custom_call.1']
    %9 = vsyncpa [#allocation4], 0
    loop: start=0, step=1, limit=4
    $region2: #{tpu_custom_call.1} parent=1 // loop_pre_header
      _
    $region3: #{tpu_custom_call.1} parent=1 // loop_header
      %s11 = sphi 0, %s15
      %p12 = scmp.ge.s32.totalorder %s11, 4
      %s19 = sphi 0, %s19
      %s21 = sphi 0, %s19
      %s22 = sphi 0, %s21
      %s36 = sphi 0, %s22
      %s42 = sphi 0, %s44
      %s45 = sphi 0, %s42
      %s46 = sphi 0, %s45
      %s62 = sphi 0, %s46
      %s68 = sphi 0, %s70
      %s71 = sphi 0, %s68
      %s72 = sphi 0, %s71
      %s88 = sphi 0, %s72
      %s94 = sphi 0, %s96
      %s97 = sphi 0, %s94
      %s98 = sphi 0, %s97
      %s114 = sphi 0, %s98
      %s120 = sphi 0, %s122
      %s123 = sphi 0, %s120
      %s124 = sphi 0, %s123
      %s140 = sphi 0, %s124
    $region4: #{tpu_custom_call.1} parent=1 // loop_header_branch
      %14 = sbr.rel (%p12) target = $region8
    $region5: #{tpu_custom_call.1} parent=1 // loop_body
      %s16 = ssub.s32 %s11, 1
      %s17 = ssub.s32 %s11, 2
      %s18 = sadd.s32 %s11, 1
      %s20 = sadd.s32 %s19, 1
      %p23 = scmp.eq.s32.totalorder %s11, 1
      %p24 = scmp.ne.s32.totalorder %s19, %s21
      %p25 = scmp.eq.s32.totalorder %s11, 0
      %p26 = por %p24, %p25
      %p27 = scmp.ne.s32.totalorder %s19, %s21
      %p28 = scmp.eq.s32.totalorder %s16, 1
      %p29 = por %p27, %p28
      %p30 = scmp.ne.s32.totalorder %s21, %s22
      %p31 = scmp.eq.s32.totalorder %s16, 0
      %p32 = por %p30, %p31
      %p33 = scmp.ne.s32.totalorder %s21, %s22
      %p34 = scmp.eq.s32.totalorder %s17, 1
      %p35 = por %p33, %p34
      %p37 = scmp.ne.s32.totalorder %s22, %s36
      %p38 = scmp.eq.s32.totalorder %s17, 0
      %p39 = por %p37, %p38
      %s40 = ssub.s32 %s11, %s18
      %p41 = scmp.eq.s32.totalorder %s40, 0
      %s43 = sadd.s32 %s42, 1
      %s44 = scalar_select %p41, %s42, %s43
      %p47 = pneg %p41
      %p48 = scmp.eq.s32.totalorder %s11, 1
      %p49 = por %p47, %p48
      %p50 = scmp.ne.s32.totalorder %s42, %s45
      %p51 = scmp.eq.s32.totalorder %s11, 0
      %p52 = por %p50, %p51
      %p53 = scmp.ne.s32.totalorder %s42, %s45
      %p54 = scmp.eq.s32.totalorder %s16, 1
      %p55 = por %p53, %p54
      %p56 = scmp.ne.s32.totalorder %s45, %s46
      %p57 = scmp.eq.s32.totalorder %s16, 0
      %p58 = por %p56, %p57
      %p59 = scmp.ne.s32.totalorder %s45, %s46
      %p60 = scmp.eq.s32.totalorder %s17, 1
      %p61 = por %p59, %p60
      %p63 = scmp.ne.s32.totalorder %s46, %s62
      %p64 = scmp.eq.s32.totalorder %s17, 0
      %p65 = por %p63, %p64
      %s66 = ssub.s32 %s11, %s18
      %p67 = scmp.eq.s32.totalorder %s66, 0
      %s69 = sadd.s32 %s68, 1
      %s70 = scalar_select %p67, %s68, %s69
      %p73 = pneg %p67
      %p74 = scmp.eq.s32.totalorder %s11, 1
      %p75 = por %p73, %p74
      %p76 = scmp.ne.s32.totalorder %s68, %s71
      %p77 = scmp.eq.s32.totalorder %s11, 0
      %p78 = por %p76, %p77
      %p79 = scmp.ne.s32.totalorder %s68, %s71
      %p80 = scmp.eq.s32.totalorder %s16, 1
      %p81 = por %p79, %p80
      %p82 = scmp.ne.s32.totalorder %s71, %s72
      %p83 = scmp.eq.s32.totalorder %s16, 0
      %p84 = por %p82, %p83
      %p85 = scmp.ne.s32.totalorder %s71, %s72
      %p86 = scmp.eq.s32.totalorder %s17, 1
      %p87 = por %p85, %p86
      %p89 = scmp.ne.s32.totalorder %s72, %s88
      %p90 = scmp.eq.s32.totalorder %s17, 0
      %p91 = por %p89, %p90
      %s92 = ssub.s32 %s11, %s18
      %p93 = scmp.eq.s32.totalorder %s92, 0
      %s95 = sadd.s32 %s94, 1
      %s96 = scalar_select %p93, %s94, %s95
      %p99 = pneg %p93
      %p100 = scmp.eq.s32.totalorder %s11, 1
      %p101 = por %p99, %p100
      %p102 = scmp.ne.s32.totalorder %s94, %s97
      %p103 = scmp.eq.s32.totalorder %s11, 0
      %p104 = por %p102, %p103
      %p105 = scmp.ne.s32.totalorder %s94, %s97
      %p106 = scmp.eq.s32.totalorder %s16, 1
      %p107 = por %p105, %p106
      %p108 = scmp.ne.s32.totalorder %s97, %s98
      %p109 = scmp.eq.s32.totalorder %s16, 0
      %p110 = por %p108, %p109
      %p111 = scmp.ne.s32.totalorder %s97, %s98
      %p112 = scmp.eq.s32.totalorder %s17, 1
      %p113 = por %p111, %p112
      %p115 = scmp.ne.s32.totalorder %s98, %s114
      %p116 = scmp.eq.s32.totalorder %s17, 0
      %p117 = por %p115, %p116
      %s118 = ssub.s32 %s11, %s18
      %p119 = scmp.eq.s32.totalorder %s118, 0
      %s121 = sadd.s32 %s120, 1
      %s122 = scalar_select %p119, %s120, %s121
      %p125 = pneg %p119
      %p126 = scmp.eq.s32.totalorder %s11, 1
      %p127 = por %p125, %p126
      %p128 = scmp.ne.s32.totalorder %s120, %s123
      %p129 = scmp.eq.s32.totalorder %s11, 0
      %p130 = por %p128, %p129
      %p131 = scmp.ne.s32.totalorder %s120, %s123
      %p132 = scmp.eq.s32.totalorder %s16, 1
      %p133 = por %p131, %p132
      %p134 = scmp.ne.s32.totalorder %s123, %s124
      %p135 = scmp.eq.s32.totalorder %s16, 0
      %p136 = por %p134, %p135
      %p137 = scmp.ne.s32.totalorder %s123, %s124
      %p138 = scmp.eq.s32.totalorder %s17, 1
      %p139 = por %p137, %p138
      %p141 = scmp.ne.s32.totalorder %s124, %s140
      %p142 = scmp.eq.s32.totalorder %s17, 0
      %p143 = por %p141, %p142
      %p144 = scmp.le.s32.totalorder 1, %s11
      %p145 = scmp.lt.s32.totalorder %s11, 3
      %p146 = pnand %p144, %p145
      %p147 = pneg %p146
      // Predicated region
      $region9: #{tpu_custom_call.1} parent=5 // pred_check
        _
      $region10: #{tpu_custom_call.1} parent=5 // pred_check_branch
        %149 = sbr.rel (%p146) target = $region12
      $region11: #{tpu_custom_call.1} parent=5 // pred_region
        %s150 = ssub.s32 %s11, 1
        // Predicated region
        $region13: #{tpu_custom_call.1} parent=11 // pred_check
          %p151 = pneg %p32
        $region14: #{tpu_custom_call.1} parent=11 // pred_check_branch
          %153 = sbr.rel (%p151) target = $region16
        $region15: #{tpu_custom_call.1} parent=11 // pred_region
          %s155 = ssub.s32 16, 16
          %156 = vsyncadd [#allocation4], %s155
          %s158 = sshll.u32 %s0, 4
          %s159 = int_to_ptr.vmem [resolvable:$true] %s158
          %161 = dma.vmem_to_smem %s159, 16, [#allocation3], [#allocation4]
        $region16: #{tpu_custom_call.1} parent=11 // pred_fallthru
          _
      $region12: #{tpu_custom_call.1} parent=5 // pred_fallthru
        _
      %p162 = scmp.lt.s32.totalorder %s11, 2
      // Predicated region
      $region17: #{tpu_custom_call.1} parent=5 // pred_check
        %p163 = pneg %p162
      $region18: #{tpu_custom_call.1} parent=5 // pred_check_branch
        %165 = sbr.rel (%p163) target = $region20
      $region19: #{tpu_custom_call.1} parent=5 // pred_region
        // Predicated region
        $region21: #{tpu_custom_call.1} parent=19 // pred_check
          %p166 = pneg %p52
        $region22: #{tpu_custom_call.1} parent=19 // pred_check_branch
          %168 = sbr.rel (%p166) target = $region24
        $region23: #{tpu_custom_call.1} parent=19 // pred_region
          %p169 = scmp.lt.s32.totalorder %s11, 1
          %s170 = scalar_select %p169, %s11, 1
          %s171 = smul.addr %s170, 6
          %s172 = smul.addr %s171, 8
          %s173 = scalar_lea.vmem %s1, %s172
        $region24: #{tpu_custom_call.1} parent=19 // pred_fallthru
          _
        // Predicated region
        $region25: #{tpu_custom_call.1} parent=19 // pred_check
          %p174 = pneg %p78
        $region26: #{tpu_custom_call.1} parent=19 // pred_check_branch
          %176 = sbr.rel (%p174) target = $region28
        $region27: #{tpu_custom_call.1} parent=19 // pred_region
          %p177 = scmp.lt.s32.totalorder %s11, 1
          %s178 = scalar_select %p177, %s11, 1
          %s179 = smul.addr %s178, 2
          %s180 = smul.addr %s179, 4
          %s181 = scalar_lea.vmem %s2, %s180
        $region28: #{tpu_custom_call.1} parent=19 // pred_fallthru
          _
        // Predicated region
        $region29: #{tpu_custom_call.1} parent=19 // pred_check
          %p182 = pneg %p104
        $region30: #{tpu_custom_call.1} parent=19 // pred_check_branch
          %184 = sbr.rel (%p182) target = $region32
        $region31: #{tpu_custom_call.1} parent=19 // pred_region
          %p185 = scmp.lt.s32.totalorder %s11, 1
          %s186 = scalar_select %p185, %s11, 1
          %s187 = smul.addr %s186, 2
          %s188 = smul.addr %s187, 4
          %s189 = scalar_lea.vmem %s3, %s188
        $region32: #{tpu_custom_call.1} parent=19 // pred_fallthru
          _
      $region20: #{tpu_custom_call.1} parent=5 // pred_fallthru
        _
      %p190 = scmp.le.s32.totalorder 1, %s11
      %p191 = scmp.lt.s32.totalorder %s11, 3
      %p192 = pnand %p190, %p191
      %p193 = pneg %p192
      // Predicated region
      $region33: #{tpu_custom_call.1} parent=5 // pred_check
        _
      $region34: #{tpu_custom_call.1} parent=5 // pred_check_branch
        %195 = sbr.rel (%p192) target = $region36
      $region35: #{tpu_custom_call.1} parent=5 // pred_region
        %s196 = ssub.s32 %s11, 1
        // Predicated region
        $region37: #{tpu_custom_call.1} parent=35 // pred_check
          %p197 = pneg %p32
        $region38: #{tpu_custom_call.1} parent=35 // pred_check_branch
          %199 = sbr.rel (%p197) target = $region40
        $region39: #{tpu_custom_call.1} parent=35 // pred_region
          %200 = dma.done [#allocation4], 16
        $region40: #{tpu_custom_call.1} parent=35 // pred_fallthru
          _
        %201 = sfence
        %p202 = pneg %p32
        %p203 = pneg %p29
        %p204 = scmp.lt.s32.totalorder %s16, 1
        %s205 = scalar_select %p204, %s16, 1
        %s206 = smul.addr %s205, 6
        %s207 = smul.addr %s206, 8
        %s208 = scalar_lea.vmem %s1, %s207
        %p209 = pneg %p58
        %p210 = pneg %p55
        %p211 = scmp.lt.s32.totalorder %s16, 1
        %s212 = scalar_select %p211, %s16, 1
        %s213 = smul.addr %s212, 2
        %s214 = smul.addr %s213, 4
        %s215 = scalar_lea.vmem %s2, %s214
        %p216 = pneg %p84
        %p217 = pneg %p81
        %p218 = scmp.lt.s32.totalorder %s16, 1
        %s219 = scalar_select %p218, %s16, 1
        %s220 = smul.addr %s219, 2
        %s221 = smul.addr %s220, 4
        %s222 = scalar_lea.vmem %s3, %s221
        %p223 = pneg %p110
        %p224 = pneg %p107
        %p225 = pneg %p136
        %p226 = pneg %p133
        %p227 = scmp.lt.s32.totalorder %s16, 1
        %s228 = scalar_select %p227, %s16, 1
        %s229 = smul.addr %s228, 6
        %s230 = smul.addr %s229, 8
        %s231 = scalar_lea.vmem %s4, %s230
        %p232 = scmp.lt.s32.totalorder %s16, 1
        %s233 = scalar_select %p232, %s16, 1
        %s234 = smul.addr %s233, 6
        %s235 = smul.addr %s234, 8
        %s236 = scalar_lea.vmem %s1, %s235
        %p237 = scmp.lt.s32.totalorder %s16, 1
        %s238 = scalar_select %p237, %s16, 1
        %s239 = smul.addr %s238, 2
        %s240 = smul.addr %s239, 4
        %s241 = scalar_lea.vmem %s2, %s240
        %p242 = scmp.lt.s32.totalorder %s16, 1
        %s243 = scalar_select %p242, %s16, 1
        %s244 = smul.addr %s243, 2
        %s245 = smul.addr %s244, 4
        %s246 = scalar_lea.vmem %s3, %s245
        %p247 = scmp.lt.s32.totalorder %s16, 1
        %s248 = scalar_select %p247, %s16, 1
        %s249 = smul.addr %s248, 6
        %s250 = smul.addr %s249, 8
        %s251 = scalar_lea.vmem %s4, %s250
        %s253 = smul.u32 %s16, 7
        %s254 = sld [smem:[#allocation3 + %s253]]
        %s255 = sadd.s32 %s253, 1
        %s256 = sld [smem:[#allocation3 + %s255]]
        %s257 = sadd.s32 %s253, 2
        %s258 = sld [smem:[#allocation3 + %s257]]
        %s259 = sadd.s32 %s253, 3
        %s260 = sld [smem:[#allocation3 + %s259]]
        %s261 = sadd.s32 %s253, 4
        %s262 = sld [smem:[#allocation3 + %s261]]
        %s263 = sadd.s32 %s253, 5
        %s264 = sld [smem:[#allocation3 + %s263]]
        %s265 = sadd.s32 %s253, 6
        %s266 = sld [smem:[#allocation3 + %s265]]
        %v267 = vld [vmem:[%s236] sm:$0xff]
        %v268 = vld [vmem:[%s236 + $0x8] sm:$0xff]
        %v269 = vstv %s254
        %v270 = vmul.f32 %v267, %v269
        %v271 = vmul.f32 %v268, %v269
        %v272 = vmax.f32 %v270, 0.0
        %v273 = vmax.f32 %v271, 0.0
        %v274 = vmin.f32 %v272, 1.0
        %v275 = vmin.f32 %v273, 1.0
        %s276 = scalar_lea.vmem %s236, 16
        %v277 = vld [vmem:[%s276] sm:$0xff]
        %v278 = vld [vmem:[%s276 + $0x8] sm:$0xff]
        %v279 = vmul.f32 %v277, %v269
        %v280 = vmul.f32 %v278, %v269
        %v281 = vmax.f32 %v279, 0.0
        %v282 = vmax.f32 %v280, 0.0
        %v283 = vmin.f32 %v281, 1.0
        %v284 = vmin.f32 %v282, 1.0
        %s285 = scalar_lea.vmem %s236, 32
        %v286 = vld [vmem:[%s285] sm:$0xff]
        %v287 = vld [vmem:[%s285 + $0x8] sm:$0xff]
        %v288 = vmul.f32 %v286, %v269
        %v289 = vmul.f32 %v287, %v269
        %v290 = vmax.f32 %v288, 0.0
        %v291 = vmax.f32 %v289, 0.0
        %v292 = vmin.f32 %v290, 1.0
        %v293 = vmin.f32 %v291, 1.0
        %v294 = vmul.f32 %v274, 0.299
        %v295 = vmul.f32 %v275, 0.299
        %v296 = vmul.f32 %v283, 0.587
        %v297 = vmul.f32 %v284, 0.587
        %v298 = vadd.f32 %v294, %v296
        %v299 = vadd.f32 %v295, %v297
        %v300 = vmul.f32 %v292, 0.114
        %v301 = vmul.f32 %v293, 0.114
        %v302 = vadd.f32 %v298, %v300
        %v303 = vadd.f32 %v299, %v301
        %vm304 = vcmask 130048
        %v305 = vsel %vm304, %v302, 0.0
        %v306 = vsel %vm304, %v303, 0.0
        %v307 = vadd.f32 %v305, %v306
        %v308 = vrot.slane %v307, 4
        %v309 = vadd.f32 %v307, %v308
        %v310 = vrot.slane %v309, 2
        %v311 = vadd.f32 %v309, %v310
        %v312 = vrot.slane %v311, 1
        %v313 = vadd.f32 %v311, %v312
        %v314 = vadd.f32 %v313, 0.0
        %v315 = vsel %vm304, %v314, 0.0
        %316 = vadd.xlane.f32.xlu0 %v315
        %v317 = vpop.xlane.xlu0 %316
        %v318 = vmul.f32 %v317, 0.00390625
        %s319 = ssub.f32 1.0, %s256
        %v320 = vstv %s319
        %v321 = vmul.f32 %v320, %v318
        %s322 = ssub.f32 1.0, %s258
        %v323 = vstv %s256
        %v324 = vmul.f32 %v323, %v274
        %v325 = vmul.f32 %v323, %v275
        %v326 = vadd.f32 %v324, %v321
        %v327 = vadd.f32 %v325, %v321
        %v328 = vmax.f32 %v326, 0.0
        %v329 = vmax.f32 %v327, 0.0
        %v330 = vmin.f32 %v328, 1.0
        %v331 = vmin.f32 %v329, 1.0
        %v332 = vmul.f32 %v323, %v283
        %v333 = vmul.f32 %v323, %v284
        %v334 = vadd.f32 %v332, %v321
        %v335 = vadd.f32 %v333, %v321
        %v336 = vmax.f32 %v334, 0.0
        %v337 = vmax.f32 %v335, 0.0
        %v338 = vmin.f32 %v336, 1.0
        %v339 = vmin.f32 %v337, 1.0
        %v340 = vmul.f32 %v323, %v292
        %v341 = vmul.f32 %v323, %v293
        %v342 = vadd.f32 %v340, %v321
        %v343 = vadd.f32 %v341, %v321
        %v344 = vmax.f32 %v342, 0.0
        %v345 = vmax.f32 %v343, 0.0
        %v346 = vmin.f32 %v344, 1.0
        %v347 = vmin.f32 %v345, 1.0
        %v348 = vmul.f32 %v330, 0.299
        %v349 = vmul.f32 %v331, 0.299
        %v350 = vmul.f32 %v338, 0.587
        %v351 = vmul.f32 %v339, 0.587
        %v352 = vadd.f32 %v348, %v350
        %v353 = vadd.f32 %v349, %v351
        %v354 = vmul.f32 %v346, 0.114
        %v355 = vmul.f32 %v347, 0.114
        %v356 = vadd.f32 %v352, %v354
        %v357 = vadd.f32 %v353, %v355
        %v358 = vstv %s322
        %v359 = vmul.f32 %v358, %v356
        %v360 = vmul.f32 %v358, %v357
        %v361 = vstv %s258
        %v362 = vmul.f32 %v361, %v330
        %v363 = vmul.f32 %v361, %v331
        %v364 = vadd.f32 %v362, %v359
        %v365 = vadd.f32 %v363, %v360
        %v366 = vmax.f32 %v364, 0.0
        %v367 = vmax.f32 %v365, 0.0
        %v368 = vmin.f32 %v366, 1.0
        %v369 = vmin.f32 %v367, 1.0
        %v370 = vmul.f32 %v361, %v338
        %v371 = vmul.f32 %v361, %v339
        %v372 = vadd.f32 %v370, %v359
        %v373 = vadd.f32 %v371, %v360
        %v374 = vmax.f32 %v372, 0.0
        %v375 = vmax.f32 %v373, 0.0
        %v376 = vmin.f32 %v374, 1.0
        %v377 = vmin.f32 %v375, 1.0
        %v378 = vmul.f32 %v361, %v346
        %v379 = vmul.f32 %v361, %v347
        %v380 = vadd.f32 %v378, %v359
        %v381 = vadd.f32 %v379, %v360
        %v382 = vmax.f32 %v380, 0.0
        %v383 = vmax.f32 %v381, 0.0
        %v384 = vmin.f32 %v382, 1.0
        %v385 = vmin.f32 %v383, 1.0
        %v386 = vmax.f32 %v368, %v376
        %v387 = vmax.f32 %v369, %v377
        %v388 = vmax.f32 %v386, %v384
        %v389 = vmax.f32 %v387, %v385
        %v390 = vmin.f32 %v368, %v376
        %v391 = vmin.f32 %v369, %v377
        %v392 = vmin.f32 %v390, %v384
        %v393 = vmin.f32 %v391, %v385
        %v394 = vsub.f32 %v388, %v392
        %v395 = vsub.f32 %v389, %v393
        %vm396 = vcmp.gt.f32.partialorder %v388, 0.0
        %vm397 = vcmp.gt.f32.partialorder %v389, 0.0
        %v398 = vsel %vm396, %v388, 1.0
        %v399 = vsel %vm397, %v389, 1.0
        %v400 = vrcp.pop %v398
        %v401 = vrcp.pop %v399
        %v402 = vmul.f32 %v394, %v400
        %v403 = vmul.f32 %v395, %v401
        %vm404 = vcmp.gt.f32.partialorder %v394, 0.0
        %vm405 = vcmp.gt.f32.partialorder %v395, 0.0
        %v406 = vsel %vm404, %v394, 1.0
        %v407 = vsel %vm405, %v395, 1.0
        %v408 = vrcp.pop %v406
        %v409 = vrcp.pop %v407
        %vm410 = vcmp.eq.f32.partialorder %v388, %v368
        %vm411 = vcmp.eq.f32.partialorder %v389, %v369
        %v412 = vsub.f32 %v376, %v384
        %v413 = vsub.f32 %v377, %v385
        %v414 = vmul.f32 %v412, %v408
        %v415 = vmul.f32 %v413, %v409
        %vm416 = vcmp.eq.f32.partialorder %v388, %v376
        %vm417 = vcmp.eq.f32.partialorder %v389, %v377
        %v418 = vsub.f32 %v384, %v368
        %v419 = vsub.f32 %v385, %v369
        %v420 = vmul.f32 %v418, %v408
        %v421 = vmul.f32 %v419, %v409
        %v422 = vadd.f32 %v420, 2.0
        %v423 = vadd.f32 %v421, 2.0
        %v424 = vsub.f32 %v368, %v376
        %v425 = vsub.f32 %v369, %v377
        %v426 = vmul.f32 %v424, %v408
        %v427 = vmul.f32 %v425, %v409
        %v428 = vadd.f32 %v426, 4.0
        %v429 = vadd.f32 %v427, 4.0
        %v430 = vsel %vm416, %v422, %v428
        %v431 = vsel %vm417, %v423, %v429
        %v432 = vsel %vm410, %v414, %v430
        %v433 = vsel %vm411, %v415, %v431
        %v434 = vmul.f32 %v432, 0.16666667
        %v435 = vmul.f32 %v433, 0.16666667
        %vm436 = vcmp.lt.f32.partialorder %v434, 0.0
        %vm437 = vcmp.lt.f32.partialorder %v435, 0.0
        %v438 = vadd.f32 %v434, 1.0
        %v439 = vadd.f32 %v435, 1.0
        %v440 = vsel %vm436, %v438, %v434
        %v441 = vsel %vm437, %v439, %v435
        %v442 = vsel %vm404, %v440, 0.0
        %v443 = vsel %vm405, %v441, 0.0
        %v444 = vstv %s260
        %v445 = vadd.f32 %v442, %v444
        %v446 = vadd.f32 %v443, %v444
        %vm447 = vcmp.lt.f32.partialorder %v445, 0.0
        %vm448 = vcmp.lt.f32.partialorder %v446, 0.0
        %v449 = vadd.f32 %v445, 1.0
        %v450 = vadd.f32 %v446, 1.0
        %v451 = vsel %vm447, %v449, %v445
        %v452 = vsel %vm448, %v450, %v446
        %vm453 = vcmp.ge.f32.partialorder %v451, 1.0
        %vm454 = vcmp.ge.f32.partialorder %v452, 1.0
        %v455 = vsub.f32 %v451, 1.0
        %v456 = vsub.f32 %v452, 1.0
        %v457 = vsel %vm453, %v455, %v451
        %v458 = vsel %vm454, %v456, %v452
        %v459 = vmul.f32 %v457, 6.0
        %v460 = vmul.f32 %v458, 6.0
        %v461 = vadd.f32 %v459, 5.0
        %v462 = vadd.f32 %v460, 5.0
        %vm463 = vcmp.ge.f32.partialorder %v461, 6.0
        %vm464 = vcmp.ge.f32.partialorder %v462, 6.0
        %v465 = vsub.f32 %v461, 6.0
        %v466 = vsub.f32 %v462, 6.0
        %v467 = vsel %vm463, %v465, %v461
        %v468 = vsel %vm464, %v466, %v462
        %v469 = vsub.f32 4.0, %v467
        %v470 = vsub.f32 4.0, %v468
        %v471 = vmin.f32 %v467, %v469
        %v472 = vmin.f32 %v468, %v470
        %v473 = vmax.f32 %v471, 0.0
        %v474 = vmax.f32 %v472, 0.0
        %v475 = vmin.f32 %v473, 1.0
        %v476 = vmin.f32 %v474, 1.0
        %v477 = vmul.f32 %v402, %v475
        %v478 = vmul.f32 %v403, %v476
        %v479 = vsub.f32 1.0, %v477
        %v480 = vsub.f32 1.0, %v478
        %v481 = vmul.f32 %v388, %v479
        %v482 = vmul.f32 %v389, %v480
        %v483 = vsub.f32 %v481, %v368
        %v484 = vsub.f32 %v482, %v369
        %v485 = vstv %s264
        %v486 = vmul.f32 %v485, %v483
        %v487 = vmul.f32 %v485, %v484
        %v488 = vadd.f32 %v368, %v486
        %v489 = vadd.f32 %v369, %v487
        %v490 = vadd.f32 %v459, 3.0
        %v491 = vadd.f32 %v460, 3.0
        %vm492 = vcmp.ge.f32.partialorder %v490, 6.0
        %vm493 = vcmp.ge.f32.partialorder %v491, 6.0
        %v494 = vsub.f32 %v490, 6.0
        %v495 = vsub.f32 %v491, 6.0
        %v496 = vsel %vm492, %v494, %v490
        %v497 = vsel %vm493, %v495, %v491
        %v498 = vsub.f32 4.0, %v496
        %v499 = vsub.f32 4.0, %v497
        %v500 = vmin.f32 %v496, %v498
        %v501 = vmin.f32 %v497, %v499
        %v502 = vmax.f32 %v500, 0.0
        %v503 = vmax.f32 %v501, 0.0
        %v504 = vmin.f32 %v502, 1.0
        %v505 = vmin.f32 %v503, 1.0
        %v506 = vmul.f32 %v402, %v504
        %v507 = vmul.f32 %v403, %v505
        %v508 = vsub.f32 1.0, %v506
        %v509 = vsub.f32 1.0, %v507
        %v510 = vmul.f32 %v388, %v508
        %v511 = vmul.f32 %v389, %v509
        %v512 = vsub.f32 %v510, %v376
        %v513 = vsub.f32 %v511, %v377
        %v514 = vmul.f32 %v485, %v512
        %v515 = vmul.f32 %v485, %v513
        %v516 = vadd.f32 %v376, %v514
        %v517 = vadd.f32 %v377, %v515
        %v518 = vadd.f32 %v459, 1.0
        %v519 = vadd.f32 %v460, 1.0
        %vm520 = vcmp.ge.f32.partialorder %v518, 6.0
        %vm521 = vcmp.ge.f32.partialorder %v519, 6.0
        %v522 = vsub.f32 %v518, 6.0
        %v523 = vsub.f32 %v519, 6.0
        %v524 = vsel %vm520, %v522, %v518
        %v525 = vsel %vm521, %v523, %v519
        %v526 = vsub.f32 4.0, %v524
        %v527 = vsub.f32 4.0, %v525
        %v528 = vmin.f32 %v524, %v526
        %v529 = vmin.f32 %v525, %v527
        %v530 = vmax.f32 %v528, 0.0
        %v531 = vmax.f32 %v529, 0.0
        %v532 = vmin.f32 %v530, 1.0
        %v533 = vmin.f32 %v531, 1.0
        %v534 = vmul.f32 %v402, %v532
        %v535 = vmul.f32 %v403, %v533
        %v536 = vsub.f32 1.0, %v534
        %v537 = vsub.f32 1.0, %v535
        %v538 = vmul.f32 %v388, %v536
        %v539 = vmul.f32 %v389, %v537
        %v540 = vsub.f32 %v538, %v384
        %v541 = vsub.f32 %v539, %v385
        %v542 = vmul.f32 %v485, %v540
        %v543 = vmul.f32 %v485, %v541
        %v544 = vadd.f32 %v384, %v542
        %v545 = vadd.f32 %v385, %v543
        %v546 = vmul.f32 %v488, 0.299
        %v547 = vmul.f32 %v489, 0.299
        %v548 = vmul.f32 %v516, 0.587
        %v549 = vmul.f32 %v517, 0.587
        %v550 = vadd.f32 %v546, %v548
        %v551 = vadd.f32 %v547, %v549
        %v552 = vmul.f32 %v544, 0.114
        %v553 = vmul.f32 %v545, 0.114
        %v554 = vadd.f32 %v550, %v552
        %v555 = vadd.f32 %v551, %v553
        %v556 = vsub.f32 %v554, %v488
        %v557 = vsub.f32 %v555, %v489
        %v558 = vstv %s262
        %v559 = vmul.f32 %v558, %v556
        %v560 = vmul.f32 %v558, %v557
        %v561 = vadd.f32 %v488, %v559
        %v562 = vadd.f32 %v489, %v560
        %v563 = vsub.f32 %v554, %v516
        %v564 = vsub.f32 %v555, %v517
        %v565 = vmul.f32 %v558, %v563
        %v566 = vmul.f32 %v558, %v564
        %v567 = vadd.f32 %v516, %v565
        %v568 = vadd.f32 %v517, %v566
        %v569 = vsub.f32 %v554, %v544
        %v570 = vsub.f32 %v555, %v545
        %v571 = vmul.f32 %v558, %v569
        %v572 = vmul.f32 %v558, %v570
        %v573 = vadd.f32 %v544, %v571
        %v574 = vadd.f32 %v545, %v572
        %575 = vst.msk [vmem:[#allocation2] sm:$0xff] %vm304, %v561
        %576 = vst.msk [vmem:[#allocation2 + $0x8] sm:$0xff] %vm304, %v562
        %s577 = scalar_lea.vmem [#allocation2], 16
        %578 = vst.msk [vmem:[%s577] sm:$0xff] %vm304, %v567
        %579 = vst.msk [vmem:[%s577 + $0x8] sm:$0xff] %vm304, %v568
        %s580 = scalar_lea.vmem [#allocation2], 32
        %581 = vst.msk [vmem:[%s580] sm:$0xff] %vm304, %v573
        %582 = vst.msk [vmem:[%s580 + $0x8] sm:$0xff] %vm304, %v574
        %p583 = scmp.gt.f32.partialorder %s266, 0.5
        // Predicated region
        $region41: #{tpu_custom_call.1} parent=35 // pred_check
          %p584 = pneg %p583
        $region42: #{tpu_custom_call.1} parent=35 // pred_check_branch
          %586 = sbr.rel (%p584) target = $region44
        $region43: #{tpu_custom_call.1} parent=35 // pred_region
          %v587 = vld [vmem:[%s241] sm:$0xf]
          %v588 = vld [vmem:[%s241 + $0x4] sm:$0xf]
          %v589 = vld [vmem:[%s246] sm:$0xf]
          %v590 = vld [vmem:[%s246 + $0x4] sm:$0xf]
          %v591 = vld [vmem:[#allocation2] sm:$0xff]
          %v592 = vld [vmem:[#allocation2 + $0x8] sm:$0xff]
          %v593 = vpack.c.bf16 %v592, %v591
          %v596 = vunpack.c.l.b16 %v587
          %v597 = vunpack.c.l.b16 %v588
          %v598 = vpack.c.b16 %v597, %v596
          %v601 = vsel %vm304, %v593, 0
          %603 = vmatprep.subr.bf16.mxu0 0
          %604 = vmatpush1.bf16.msra.mxu0 %v598
          %605 = vmatprep.subr.bf16.mxu0 0
          %606 = vmatpush1.bf16.msra.mxu0 0
          %607 = vmatprep.subr.bf16.mxu0 0
          %608 = vmatpush1.bf16.msra.mxu0 0
          %609 = vmatprep.subr.bf16.mxu0 0
          %610 = vmatpush1.bf16.msra.mxu0 0
          %611 = vmatprep.subr.bf16.mxu0 0
          %612 = vmatpush1.bf16.msra.mxu0 0
          %613 = vmatprep.subr.bf16.mxu0 0
          %614 = vmatpush1.bf16.msra.mxu0 0
          %615 = vmatprep.subr.bf16.mxu0 0
          %616 = vmatpush1.bf16.msra.mxu0 0
          %617 = vmatprep.subr.bf16.mxu0 0
          %618 = vmatpush1.bf16.msra.mxu0 0
          %619 = vmatprep.subr.bf16.mxu0 0
          %620 = vmatpush1.bf16.msra.mxu0 0
          %621 = vmatprep.subr.bf16.mxu0 0
          %622 = vmatpush1.bf16.msra.mxu0 0
          %623 = vmatprep.subr.bf16.mxu0 0
          %624 = vmatpush1.bf16.msra.mxu0 0
          %625 = vmatprep.subr.bf16.mxu0 0
          %626 = vmatpush1.bf16.msra.mxu0 0
          %627 = vmatprep.subr.bf16.mxu0 0
          %628 = vmatpush1.bf16.msra.mxu0 0
          %629 = vmatprep.subr.bf16.mxu0 0
          %630 = vmatpush1.bf16.msra.mxu0 0
          %631 = vmatprep.subr.bf16.mxu0 0
          %632 = vmatpush1.bf16.msra.mxu0 0
          %633 = vmatprep.subr.bf16.mxu0 0
          %634 = vmatpush1.bf16.msra.mxu0 0
          %635 = vmatprep.mubr.bf16.mxu0 0
          %636 = vmatmul.mubr.bf16.gmra.mrb[0].mxu0 %v601
          %v637 = vpop.f32.mrb[0].mxu0
          %v638 = vadd.f32 0.0, %v637
          %v639 = vpop.f32.mrb[0].mxu0
          %v640 = vpop.f32.mrb[0].mxu0
          %v641 = vadd.f32 0.0, %v640
          %v642 = vpop.f32.mrb[0].mxu0
          %643 = vdwg.mxu0
          %v644 = vpack.c.bf16 %v641, %v638
          %v647 = vunpack.c.l.b16 %v589
          %v648 = vunpack.c.l.b16 %v590
          %v649 = vpack.c.b16 %v648, %v647
          %v651 = vsel %vm304, %v649, 0
          %653 = vmatprep.subr.bf16.mxu0 0
          %654 = vmatpush1.bf16.msra.mxu0 %v644
          %655 = vmatprep.subr.bf16.mxu0 0
          %656 = vmatpush1.bf16.msra.mxu0 0
          %657 = vmatprep.subr.bf16.mxu0 0
          %658 = vmatpush1.bf16.msra.mxu0 0
          %659 = vmatprep.subr.bf16.mxu0 0
          %660 = vmatpush1.bf16.msra.mxu0 0
          %661 = vmatprep.subr.bf16.mxu0 0
          %662 = vmatpush1.bf16.msra.mxu0 0
          %663 = vmatprep.subr.bf16.mxu0 0
          %664 = vmatpush1.bf16.msra.mxu0 0
          %665 = vmatprep.subr.bf16.mxu0 0
          %666 = vmatpush1.bf16.msra.mxu0 0
          %667 = vmatprep.subr.bf16.mxu0 0
          %668 = vmatpush1.bf16.msra.mxu0 0
          %669 = vmatprep.subr.bf16.mxu0 0
          %670 = vmatpush1.bf16.msra.mxu0 0
          %671 = vmatprep.subr.bf16.mxu0 0
          %672 = vmatpush1.bf16.msra.mxu0 0
          %673 = vmatprep.subr.bf16.mxu0 0
          %674 = vmatpush1.bf16.msra.mxu0 0
          %675 = vmatprep.subr.bf16.mxu0 0
          %676 = vmatpush1.bf16.msra.mxu0 0
          %677 = vmatprep.subr.bf16.mxu0 0
          %678 = vmatpush1.bf16.msra.mxu0 0
          %679 = vmatprep.subr.bf16.mxu0 0
          %680 = vmatpush1.bf16.msra.mxu0 0
          %681 = vmatprep.subr.bf16.mxu0 0
          %682 = vmatpush1.bf16.msra.mxu0 0
          %683 = vmatprep.subr.bf16.mxu0 0
          %684 = vmatpush1.bf16.msra.mxu0 0
          %685 = vmatprep.mubr.bf16.mxu0 0
          %686 = vmatmul.mubr.bf16.gmra.mrb[0].mxu0 %v651
          %v687 = vpop.f32.mrb[0].mxu0
          %v688 = vadd.f32 0.0, %v687
          %v689 = vpop.f32.mrb[0].mxu0
          %v690 = vpop.f32.mrb[0].mxu0
          %v691 = vadd.f32 0.0, %v690
          %v692 = vpop.f32.mrb[0].mxu0
          %693 = vdwg.mxu0
          %694 = vst.msk [vmem:[%s251] sm:$0xff] %vm304, %v688
          %695 = vst.msk [vmem:[%s251 + $0x8] sm:$0xff] %vm304, %v691
          %v696 = vld [vmem:[#allocation2 + $0x10] sm:$0xff]
          %v697 = vld [vmem:[#allocation2 + $0x18] sm:$0xff]
          %v698 = vpack.c.bf16 %v697, %v696
          %v700 = vsel %vm304, %v698, 0
          %702 = vmatprep.subr.bf16.mxu0 0
          %703 = vmatpush1.bf16.msra.mxu0 %v598
          %704 = vmatprep.subr.bf16.mxu0 0
          %705 = vmatpush1.bf16.msra.mxu0 0
          %706 = vmatprep.subr.bf16.mxu0 0
          %707 = vmatpush1.bf16.msra.mxu0 0
          %708 = vmatprep.subr.bf16.mxu0 0
          %709 = vmatpush1.bf16.msra.mxu0 0
          %710 = vmatprep.subr.bf16.mxu0 0
          %711 = vmatpush1.bf16.msra.mxu0 0
          %712 = vmatprep.subr.bf16.mxu0 0
          %713 = vmatpush1.bf16.msra.mxu0 0
          %714 = vmatprep.subr.bf16.mxu0 0
          %715 = vmatpush1.bf16.msra.mxu0 0
          %716 = vmatprep.subr.bf16.mxu0 0
          %717 = vmatpush1.bf16.msra.mxu0 0
          %718 = vmatprep.subr.bf16.mxu0 0
          %719 = vmatpush1.bf16.msra.mxu0 0
          %720 = vmatprep.subr.bf16.mxu0 0
          %721 = vmatpush1.bf16.msra.mxu0 0
          %722 = vmatprep.subr.bf16.mxu0 0
          %723 = vmatpush1.bf16.msra.mxu0 0
          %724 = vmatprep.subr.bf16.mxu0 0
          %725 = vmatpush1.bf16.msra.mxu0 0
          %726 = vmatprep.subr.bf16.mxu0 0
          %727 = vmatpush1.bf16.msra.mxu0 0
          %728 = vmatprep.subr.bf16.mxu0 0
          %729 = vmatpush1.bf16.msra.mxu0 0
          %730 = vmatprep.subr.bf16.mxu0 0
          %731 = vmatpush1.bf16.msra.mxu0 0
          %732 = vmatprep.subr.bf16.mxu0 0
          %733 = vmatpush1.bf16.msra.mxu0 0
          %734 = vmatprep.mubr.bf16.mxu0 0
          %735 = vmatmul.mubr.bf16.gmra.mrb[0].mxu0 %v700
          %v736 = vpop.f32.mrb[0].mxu0
          %v737 = vadd.f32 0.0, %v736
          %v738 = vpop.f32.mrb[0].mxu0
          %v739 = vpop.f32.mrb[0].mxu0
          %v740 = vadd.f32 0.0, %v739
          %v741 = vpop.f32.mrb[0].mxu0
          %742 = vdwg.mxu0
          %v743 = vpack.c.bf16 %v740, %v737
          %744 = vmatprep.subr.bf16.mxu0 0
          %745 = vmatpush1.bf16.msra.mxu0 %v743
          %746 = vmatprep.subr.bf16.mxu0 0
          %747 = vmatpush1.bf16.msra.mxu0 0
          %748 = vmatprep.subr.bf16.mxu0 0
          %749 = vmatpush1.bf16.msra.mxu0 0
          %750 = vmatprep.subr.bf16.mxu0 0
          %751 = vmatpush1.bf16.msra.mxu0 0
          %752 = vmatprep.subr.bf16.mxu0 0
          %753 = vmatpush1.bf16.msra.mxu0 0
          %754 = vmatprep.subr.bf16.mxu0 0
          %755 = vmatpush1.bf16.msra.mxu0 0
          %756 = vmatprep.subr.bf16.mxu0 0
          %757 = vmatpush1.bf16.msra.mxu0 0
          %758 = vmatprep.subr.bf16.mxu0 0
          %759 = vmatpush1.bf16.msra.mxu0 0
          %760 = vmatprep.subr.bf16.mxu0 0
          %761 = vmatpush1.bf16.msra.mxu0 0
          %762 = vmatprep.subr.bf16.mxu0 0
          %763 = vmatpush1.bf16.msra.mxu0 0
          %764 = vmatprep.subr.bf16.mxu0 0
          %765 = vmatpush1.bf16.msra.mxu0 0
          %766 = vmatprep.subr.bf16.mxu0 0
          %767 = vmatpush1.bf16.msra.mxu0 0
          %768 = vmatprep.subr.bf16.mxu0 0
          %769 = vmatpush1.bf16.msra.mxu0 0
          %770 = vmatprep.subr.bf16.mxu0 0
          %771 = vmatpush1.bf16.msra.mxu0 0
          %772 = vmatprep.subr.bf16.mxu0 0
          %773 = vmatpush1.bf16.msra.mxu0 0
          %774 = vmatprep.subr.bf16.mxu0 0
          %775 = vmatpush1.bf16.msra.mxu0 0
          %776 = vmatprep.mubr.bf16.mxu0 0
          %777 = vmatmul.mubr.bf16.gmra.mrb[0].mxu0 %v651
          %v778 = vpop.f32.mrb[0].mxu0
          %v779 = vadd.f32 0.0, %v778
          %v780 = vpop.f32.mrb[0].mxu0
          %v781 = vpop.f32.mrb[0].mxu0
          %v782 = vadd.f32 0.0, %v781
          %v783 = vpop.f32.mrb[0].mxu0
          %784 = vdwg.mxu0
          %785 = vst.msk [vmem:[%s251 + $0x10] sm:$0xff] %vm304, %v779
          %786 = vst.msk [vmem:[%s251 + $0x18] sm:$0xff] %vm304, %v782
          %v787 = vld [vmem:[#allocation2 + $0x20] sm:$0xff]
          %v788 = vld [vmem:[#allocation2 + $0x28] sm:$0xff]
          %v789 = vpack.c.bf16 %v788, %v787
          %v791 = vsel %vm304, %v789, 0
          %793 = vmatprep.subr.bf16.mxu0 0
          %794 = vmatpush1.bf16.msra.mxu0 %v598
          %795 = vmatprep.subr.bf16.mxu0 0
          %796 = vmatpush1.bf16.msra.mxu0 0
          %797 = vmatprep.subr.bf16.mxu0 0
          %798 = vmatpush1.bf16.msra.mxu0 0
          %799 = vmatprep.subr.bf16.mxu0 0
          %800 = vmatpush1.bf16.msra.mxu0 0
          %801 = vmatprep.subr.bf16.mxu0 0
          %802 = vmatpush1.bf16.msra.mxu0 0
          %803 = vmatprep.subr.bf16.mxu0 0
          %804 = vmatpush1.bf16.msra.mxu0 0
          %805 = vmatprep.subr.bf16.mxu0 0
          %806 = vmatpush1.bf16.msra.mxu0 0
          %807 = vmatprep.subr.bf16.mxu0 0
          %808 = vmatpush1.bf16.msra.mxu0 0
          %809 = vmatprep.subr.bf16.mxu0 0
          %810 = vmatpush1.bf16.msra.mxu0 0
          %811 = vmatprep.subr.bf16.mxu0 0
          %812 = vmatpush1.bf16.msra.mxu0 0
          %813 = vmatprep.subr.bf16.mxu0 0
          %814 = vmatpush1.bf16.msra.mxu0 0
          %815 = vmatprep.subr.bf16.mxu0 0
          %816 = vmatpush1.bf16.msra.mxu0 0
          %817 = vmatprep.subr.bf16.mxu0 0
          %818 = vmatpush1.bf16.msra.mxu0 0
          %819 = vmatprep.subr.bf16.mxu0 0
          %820 = vmatpush1.bf16.msra.mxu0 0
          %821 = vmatprep.subr.bf16.mxu0 0
          %822 = vmatpush1.bf16.msra.mxu0 0
          %823 = vmatprep.subr.bf16.mxu0 0
          %824 = vmatpush1.bf16.msra.mxu0 0
          %825 = vmatprep.mubr.bf16.mxu0 0
          %826 = vmatmul.mubr.bf16.gmra.mrb[0].mxu0 %v791
          %v827 = vpop.f32.mrb[0].mxu0
          %v828 = vadd.f32 0.0, %v827
          %v829 = vpop.f32.mrb[0].mxu0
          %v830 = vpop.f32.mrb[0].mxu0
          %v831 = vadd.f32 0.0, %v830
          %v832 = vpop.f32.mrb[0].mxu0
          %833 = vdwg.mxu0
          %v834 = vpack.c.bf16 %v831, %v828
          %835 = vmatprep.subr.bf16.mxu0 0
          %836 = vmatpush1.bf16.msra.mxu0 %v834
          %837 = vmatprep.subr.bf16.mxu0 0
          %838 = vmatpush1.bf16.msra.mxu0 0
          %839 = vmatprep.subr.bf16.mxu0 0
          %840 = vmatpush1.bf16.msra.mxu0 0
          %841 = vmatprep.subr.bf16.mxu0 0
          %842 = vmatpush1.bf16.msra.mxu0 0
          %843 = vmatprep.subr.bf16.mxu0 0
          %844 = vmatpush1.bf16.msra.mxu0 0
          %845 = vmatprep.subr.bf16.mxu0 0
          %846 = vmatpush1.bf16.msra.mxu0 0
          %847 = vmatprep.subr.bf16.mxu0 0
          %848 = vmatpush1.bf16.msra.mxu0 0
          %849 = vmatprep.subr.bf16.mxu0 0
          %850 = vmatpush1.bf16.msra.mxu0 0
          %851 = vmatprep.subr.bf16.mxu0 0
          %852 = vmatpush1.bf16.msra.mxu0 0
          %853 = vmatprep.subr.bf16.mxu0 0
          %854 = vmatpush1.bf16.msra.mxu0 0
          %855 = vmatprep.subr.bf16.mxu0 0
          %856 = vmatpush1.bf16.msra.mxu0 0
          %857 = vmatprep.subr.bf16.mxu0 0
          %858 = vmatpush1.bf16.msra.mxu0 0
          %859 = vmatprep.subr.bf16.mxu0 0
          %860 = vmatpush1.bf16.msra.mxu0 0
          %861 = vmatprep.subr.bf16.mxu0 0
          %862 = vmatpush1.bf16.msra.mxu0 0
          %863 = vmatprep.subr.bf16.mxu0 0
          %864 = vmatpush1.bf16.msra.mxu0 0
          %865 = vmatprep.subr.bf16.mxu0 0
          %866 = vmatpush1.bf16.msra.mxu0 0
          %867 = vmatprep.mubr.bf16.mxu0 0
          %868 = vmatmul.mubr.bf16.gmra.mrb[0].mxu0 %v651
          %v869 = vpop.f32.mrb[0].mxu0
          %v870 = vadd.f32 0.0, %v869
          %v871 = vpop.f32.mrb[0].mxu0
          %v872 = vpop.f32.mrb[0].mxu0
          %v873 = vadd.f32 0.0, %v872
          %v874 = vpop.f32.mrb[0].mxu0
          %875 = vdwg.mxu0
          %876 = vst.msk [vmem:[%s251 + $0x20] sm:$0xff] %vm304, %v870
          %877 = vst.msk [vmem:[%s251 + $0x28] sm:$0xff] %vm304, %v873
        $region44: #{tpu_custom_call.1} parent=35 // pred_fallthru
          _
        %p878 = scmp.le.f32.partialorder %s266, 0.5
        // Predicated region
        $region45: #{tpu_custom_call.1} parent=35 // pred_check
          %p879 = pneg %p878
        $region46: #{tpu_custom_call.1} parent=35 // pred_check_branch
          %881 = sbr.rel (%p879) target = $region48
        $region47: #{tpu_custom_call.1} parent=35 // pred_region
          %v882 = vld [vmem:[#allocation2] sm:$0xff]
          %v883 = vld [vmem:[#allocation2 + $0x8] sm:$0xff]
          %v884 = vld [vmem:[#allocation2 + $0x10] sm:$0xff]
          %v885 = vld [vmem:[#allocation2 + $0x18] sm:$0xff]
          %v886 = vld [vmem:[#allocation2 + $0x20] sm:$0xff]
          %v887 = vld [vmem:[#allocation2 + $0x28] sm:$0xff]
          %888 = vst.msk [vmem:[%s251] sm:$0xff] %vm304, %v882
          %889 = vst.msk [vmem:[%s251 + $0x8] sm:$0xff] %vm304, %v883
          %890 = vst.msk [vmem:[%s251 + $0x10] sm:$0xff] %vm304, %v884
          %891 = vst.msk [vmem:[%s251 + $0x18] sm:$0xff] %vm304, %v885
          %892 = vst.msk [vmem:[%s251 + $0x20] sm:$0xff] %vm304, %v886
          %893 = vst.msk [vmem:[%s251 + $0x28] sm:$0xff] %vm304, %v887
        $region48: #{tpu_custom_call.1} parent=35 // pred_fallthru
          _
        %p894 = scmp.lt.s32.totalorder %s16, 1
        %s895 = scalar_select %p894, %s16, 1
        %s896 = smul.addr %s895, 6
        %s897 = smul.addr %s896, 8
        %s898 = scalar_lea.vmem %s4, %s897
        // Predicated region
        $region49: #{tpu_custom_call.1} parent=35 // pred_check
          %p899 = pneg %p133
        $region50: #{tpu_custom_call.1} parent=35 // pred_check_branch
          %901 = sbr.rel (%p899) target = $region52
        $region51: #{tpu_custom_call.1} parent=35 // pred_region
          _
        $region52: #{tpu_custom_call.1} parent=35 // pred_fallthru
          _
      $region36: #{tpu_custom_call.1} parent=5 // pred_fallthru
        _
      %p902 = scmp.le.s32.totalorder 2, %s11
      // Predicated region
      $region53: #{tpu_custom_call.1} parent=5 // pred_check
        %p903 = pneg %p902
      $region54: #{tpu_custom_call.1} parent=5 // pred_check_branch
        %905 = sbr.rel (%p903) target = $region56
      $region55: #{tpu_custom_call.1} parent=5 // pred_region
        %s906 = ssub.s32 %s11, 2
        // Predicated region
        $region57: #{tpu_custom_call.1} parent=55 // pred_check
          %p907 = pneg %p139
        $region58: #{tpu_custom_call.1} parent=55 // pred_check_branch
          %909 = sbr.rel (%p907) target = $region60
        $region59: #{tpu_custom_call.1} parent=55 // pred_region
          %p910 = scmp.lt.s32.totalorder %s17, 1
          %s911 = scalar_select %p910, %s17, 1
          %s912 = smul.addr %s911, 6
          %s913 = smul.addr %s912, 8
          %s914 = scalar_lea.vmem %s4, %s913
        $region60: #{tpu_custom_call.1} parent=55 // pred_fallthru
          _
      $region56: #{tpu_custom_call.1} parent=5 // pred_fallthru
        _
    $region6: #{tpu_custom_call.1} parent=1 // loop_footer
      %s15 = sadd.s32 1, %s11
    $region7: #{tpu_custom_call.1} parent=1 // loop_footer_branch
      %10 = sbr.rel target = $region3
    $region8: #{tpu_custom_call.1} parent=1 // loop_exit
      _
    %915 = vsyncpa [#allocation4], 1
    %s916 = scalar_lea.sflag [#allocation4], 1
    %917 = vsyncpa %s916, 1

</llo_original>
